<compile_context>
chip_gen: v7x
topology: tpu7x:2x2x1
jax: 0.10.0
libtpu: 0.0.40
codegen_flags: <defaults>
</compile_context>

<pallas_src>
import functools

import jax
import jax.numpy as jnp
from jax import lax
from jax.experimental import pallas as pl
from jax.experimental.pallas import tpu as pltpu


def _conv3x3_tanh_kernel(x_ref, w_ref, b_ref, o_ref, *, H, W):
    """3x3 same-padding conv + bias + tanh, channels-first, shift-and-matmul.

    x_ref: (1, bpg*Cin, H*W)  flattened NCHW input for bpg batch elements
    w_ref: (9, Cc, Cin)       per-tap weights, tap index t = dy*3 + dx
    b_ref: (Cc, 1)            bias
    o_ref: (1, bpg*Cc, H*W)   conv+tanh output, channels-major, lane-dense
    """
    Cc = w_ref.shape[1]
    Cin = w_ref.shape[2]
    HW = x_ref.shape[2]
    bpg = x_ref.shape[1] // Cin

    x = x_ref[0]  # (bpg*Cin, HW) f32, dense 256-wide lane axis

    # Per-lane pixel coordinates for the zero-padding halo masks.  Use bit ops
    # (not div/mod) when W is a power of two to stay on plain VPU ops.
    lane = lax.broadcasted_iota(jnp.int32, x.shape, 1)
    if (W & (W - 1)) == 0:
        wpos = jnp.bitwise_and(lane, W - 1)
        hpos = jnp.right_shift(lane, (W - 1).bit_length())
    else:
        wpos = lane % W
        hpos = lane // W
    h_ok = {0: hpos >= 1, 1: None, 2: hpos < (H - 1)}
    w_ok = {0: wpos >= 1, 1: None, 2: wpos < (W - 1)}

    accs = [jnp.zeros((Cc, HW), jnp.float32) for _ in range(bpg)]

    for dy in range(3):
        for dx in range(3):
            # Tap (dy, dx) needs x[.., h+dy-1, w+dx-1]: a lane shift of the
            # flattened image by s, with out-of-image lanes zeroed.  All
            # wrap-around lanes of the roll are also killed by the mask.
            s = (dy - 1) * W + (dx - 1)
            shifted = x if s == 0 else pltpu.roll(x, (-s) % HW, axis=1)

            mask = None
            if h_ok[dy] is not None and w_ok[dx] is not None:
                mask = jnp.logical_and(h_ok[dy], w_ok[dx])
            elif h_ok[dy] is not None:
                mask = h_ok[dy]
            elif w_ok[dx] is not None:
                mask = w_ok[dx]
            if mask is not None:
                shifted = jnp.where(mask, shifted, 0.0)

            w_tap = w_ref[dy * 3 + dx]  # (Cc, Cin), static index
            for b in range(bpg):
                rhs = shifted[b * Cin:(b + 1) * Cin, :]          # (Cin, HW)
                accs[b] = accs[b] + jnp.dot(
                    w_tap, rhs, preferred_element_type=jnp.float32)

    bias = b_ref[...]                                            # (Cc, 1)
    planes = [jnp.tanh(a + bias) for a in accs]                  # (Cc, HW)
    y = jnp.concatenate(planes, axis=0) if bpg > 1 else planes[0]
    o_ref[0] = y.astype(o_ref.dtype)                             # dense vst


def _tensorcores_per_chip():
    # v7x (and v4/v5p-class megacore chips) expose 2 TensorCores per device;
    # v5e/v6e have one.  Unknown device kinds fall back to 1 (safe).
    try:
        kind = str(jax.devices()[0].device_kind).lower()
    except Exception:
        return 1
    if any(tag in kind for tag in ("v7", "v5p", "v4")):
        return 2
    return 1


def subpixel_conv(x_nchw, weight_oihw, bias, scale_factor=2, grid_steps=None):
    """Forward pass of SubPixelConv (2D), matching the PyTorch module."""
    r = scale_factor
    B, Cin, H, W = x_nchw.shape
    Cc = weight_oihw.shape[0]          # = Cout * r * r
    Cout = Cc // (r * r)
    HW = H * W

    if grid_steps is None:
        n_tc = _tensorcores_per_chip()
        grid_steps = n_tc if (n_tc > 1 and B % n_tc == 0) else 1
    assert B % grid_steps == 0
    bpg = B // grid_steps              # batch elements folded per grid step

    # Metadata-only reshapes (row-major, no HBM copies): NCHW is consumed
    # directly with the flattened image on the lane axis.
    x3 = x_nchw.reshape(grid_steps, bpg * Cin, HW)
    # OIHW -> (tap, O, I): tap t = dy*3 + dx.  Tiny one-off parameter fold.
    w_taps = jnp.transpose(weight_oihw, (2, 3, 0, 1)).reshape(9, Cc, Cin)
    b2 = bias.reshape(Cc, 1)

    kernel = functools.partial(_conv3x3_tanh_kernel, H=H, W=W)
    conv_tanh = pl.pallas_call(
        kernel,
        out_shape=jax.ShapeDtypeStruct((grid_steps, bpg * Cc, HW), jnp.float32),
        grid=(grid_steps,),
        in_specs=[
            pl.BlockSpec((1, bpg * Cin, HW), lambda i: (i, 0, 0)),
            pl.BlockSpec((9, Cc, Cin), lambda i: (0, 0, 0)),   # resident
            pl.BlockSpec((Cc, 1), lambda i: (0, 0)),           # resident
        ],
        out_specs=pl.BlockSpec((1, bpg * Cc, HW), lambda i: (i, 0, 0)),
        compiler_params=pltpu.CompilerParams(
            dimension_semantics=("parallel",)),
    )

    y = conv_tanh(x3, w_taps, b2).reshape(B, Cc, H, W)

    # PixelShuffle (PyTorch NCHW order): channel c = cout*r*r + ry*r + rx.
    # TODO(synk): trailing transpose is XLA glue; let a real consumer absorb it.
    y = y.reshape(B, Cout, r, r, H, W)                 # (B, Cout, ry, rx, H, W)
    y = jnp.transpose(y, (0, 1, 4, 2, 5, 3))           # (B, Cout, H, ry, W, rx)
    return y.reshape(B, Cout, H * r, W * r)            # NCHW output


def _reference(x_nchw, weight_oihw, bias, scale_factor=2):
    """Pure-JAX reference matching the PyTorch module."""
    r = scale_factor
    B, Cin, H, W = x_nchw.shape
    Cc = weight_oihw.shape[0]
    Cout = Cc // (r * r)
    y = lax.conv_general_dilated(
        x_nchw, weight_oihw, window_strides=(1, 1), padding=((1, 1), (1, 1)),
        dimension_numbers=("NCHW", "OIHW", "NCHW"))
    y = jnp.tanh(y + bias.reshape(1, Cc, 1, 1))
    y = y.reshape(B, Cout, r, r, H, W)
    y = jnp.transpose(y, (0, 1, 4, 2, 5, 3))
    return y.reshape(B, Cout, H * r, W * r)


if __name__ == "__main__":
    # Module config: spatial_dims=2, in_channels=4, out_channels=4,
    # scale_factor=2  ->  conv: Conv2d(4, 4*2*2=16, kernel=3, pad=1, bias=True)
    B, Cin, H, W = 2, 4, 16, 16
    Cout, r = 4, 2
    Cc = Cout * r * r

    key = jax.random.PRNGKey(0)
    kx, kw, kb = jax.random.split(key, 3)
    x = jax.random.normal(kx, (B, Cin, H, W), dtype=jnp.float32)
    weight = 0.1 * jax.random.normal(kw, (Cc, Cin, 3, 3), dtype=jnp.float32)
    bias = 0.1 * jax.random.normal(kb, (Cc,), dtype=jnp.float32)

    fwd = jax.jit(functools.partial(subpixel_conv, scale_factor=r))
    out = jax.block_until_ready(fwd(x, weight, bias))

    ref = jax.block_until_ready(_reference(x, weight, bias, scale_factor=r))
    assert out.shape == (B, Cout, H * r, W * r), out.shape
    assert jnp.allclose(out, ref, atol=1e-5, rtol=1e-5), \
        float(jnp.max(jnp.abs(out - ref)))

    print("KERNEL_OK")
</pallas_src>

<mosaic_0001>
module attributes {stable_mosaic.version = 11 : i64} {
  func.func @_conv3x3_tanh_kernel(%arg0: i32, %arg1: memref<1x8x256xf32, #tpu.memory_space<vmem>>, %arg2: memref<9x16x4xf32, #tpu.memory_space<vmem>>, %arg3: memref<16x1xf32, #tpu.memory_space<vmem>>, %arg4: memref<1x32x256xf32, #tpu.memory_space<vmem>>) attributes {dimension_semantics = [#tpu.dimension_semantics<parallel>], iteration_bounds = array<i64: 1>, scalar_prefetch = 0 : i64, scratch_operands = 0 : i64, tpu.core_type = #tpu.core_type<tc>, window_params = [{transform_indices = @transform_0, window_bounds = array<i64: 1, 8, 256>}, {pipeline_mode = #tpu.pipeline_mode<synchronous>, transform_indices = @transform_1, window_bounds = array<i64: 9, 16, 4>}, {pipeline_mode = #tpu.pipeline_mode<synchronous>, transform_indices = @transform_2, window_bounds = array<i64: 16, 1>}, {transform_indices = @transform_3, window_bounds = array<i64: 1, 32, 256>}]} {
    %c0 = arith.constant 0 : index
    %c0_0 = arith.constant 0 : index
    %c0_1 = arith.constant 0 : index
    %0 = vector.load %arg1[%c0, %c0_0, %c0_1] : memref<1x8x256xf32, #tpu.memory_space<vmem>>, vector<1x8x256xf32>
    %1 = vector.shape_cast %0 : vector<1x8x256xf32> to vector<8x256xf32>
    %2 = tpu.iota {dimensions = array<i32: 1>} : vector<8x256xi32>
    %c15_i32 = arith.constant 15 : i32
    %3 = vector.broadcast %c15_i32 : i32 to vector<8x256xi32>
    %4 = arith.andi %2, %3 : vector<8x256xi32>
    %c4_i32 = arith.constant 4 : i32
    %5 = vector.broadcast %c4_i32 : i32 to vector<8x256xi32>
    %6 = arith.shrsi %2, %5 : vector<8x256xi32>
    %c1_i32 = arith.constant 1 : i32
    %7 = vector.broadcast %c1_i32 : i32 to vector<8x256xi32>
    %8 = arith.cmpi sge, %6, %7 : vector<8x256xi32>
    %c15_i32_2 = arith.constant 15 : i32
    %9 = vector.broadcast %c15_i32_2 : i32 to vector<8x256xi32>
    %10 = arith.cmpi slt, %6, %9 : vector<8x256xi32>
    %c1_i32_3 = arith.constant 1 : i32
    %11 = vector.broadcast %c1_i32_3 : i32 to vector<8x256xi32>
    %12 = arith.cmpi sge, %4, %11 : vector<8x256xi32>
    %c15_i32_4 = arith.constant 15 : i32
    %13 = vector.broadcast %c15_i32_4 : i32 to vector<8x256xi32>
    %14 = arith.cmpi slt, %4, %13 : vector<8x256xi32>
    %cst = arith.constant 0.000000e+00 : f32
    %15 = vector.broadcast %cst : f32 to vector<16x256xf32>
    %cst_5 = arith.constant 0.000000e+00 : f32
    %16 = vector.broadcast %cst_5 : f32 to vector<16x256xf32>
    %c17_i32 = arith.constant 17 : i32
    %17 = tpu.dynamic_rotate %1 by %c17_i32 dim 1 : vector<8x256xf32>, i32 -> vector<8x256xf32>
    %18 = arith.andi %8, %12 : vector<8x256xi1>
    %cst_6 = arith.constant 0.000000e+00 : f32
    %19 = vector.broadcast %cst_6 : f32 to vector<8x256xf32>
    %20 = arith.select %18, %17, %19 : vector<8x256xi1>, vector<8x256xf32>
    %c0_7 = arith.constant 0 : index
    %c0_8 = arith.constant 0 : index
    %c0_9 = arith.constant 0 : index
    %21 = vector.load %arg2[%c0_7, %c0_8, %c0_9] : memref<9x16x4xf32, #tpu.memory_space<vmem>>, vector<1x16x4xf32>
    %22 = vector.shape_cast %21 : vector<1x16x4xf32> to vector<16x4xf32>
    %23 = vector.extract_strided_slice %20 {offsets = [0, 0], sizes = [4, 256], strides = [1, 1]} : vector<8x256xf32> to vector<4x256xf32>
    %cst_10 = arith.constant dense<0.000000e+00> : vector<16x256xf32>
    %24 = tpu.matmul %22, %23, %cst_10 {dimension_numbers = #tpu.dot_dimension_numbers<[1], [0], [0], [1], [0, 0, 1, 1], [], []>} : vector<16x4xf32>, vector<4x256xf32>, vector<16x256xf32> -> vector<16x256xf32>
    %25 = arith.addf %15, %24 : vector<16x256xf32>
    %26 = vector.extract_strided_slice %20 {offsets = [4, 0], sizes = [4, 256], strides = [1, 1]} : vector<8x256xf32> to vector<4x256xf32>
    %cst_11 = arith.constant dense<0.000000e+00> : vector<16x256xf32>
    %27 = tpu.matmul %22, %26, %cst_11 {dimension_numbers = #tpu.dot_dimension_numbers<[1], [0], [0], [1], [0, 0, 1, 1], [], []>} : vector<16x4xf32>, vector<4x256xf32>, vector<16x256xf32> -> vector<16x256xf32>
    %28 = arith.addf %16, %27 : vector<16x256xf32>
    %c16_i32 = arith.constant 16 : i32
    %29 = tpu.dynamic_rotate %1 by %c16_i32 dim 1 : vector<8x256xf32>, i32 -> vector<8x256xf32>
    %cst_12 = arith.constant 0.000000e+00 : f32
    %30 = vector.broadcast %cst_12 : f32 to vector<8x256xf32>
    %31 = arith.select %8, %29, %30 : vector<8x256xi1>, vector<8x256xf32>
    %c1 = arith.constant 1 : index
    %c0_13 = arith.constant 0 : index
    %c0_14 = arith.constant 0 : index
    %32 = vector.load %arg2[%c1, %c0_13, %c0_14] : memref<9x16x4xf32, #tpu.memory_space<vmem>>, vector<1x16x4xf32>
    %33 = vector.shape_cast %32 : vector<1x16x4xf32> to vector<16x4xf32>
    %34 = vector.extract_strided_slice %31 {offsets = [0, 0], sizes = [4, 256], strides = [1, 1]} : vector<8x256xf32> to vector<4x256xf32>
    %cst_15 = arith.constant dense<0.000000e+00> : vector<16x256xf32>
    %35 = tpu.matmul %33, %34, %cst_15 {dimension_numbers = #tpu.dot_dimension_numbers<[1], [0], [0], [1], [0, 0, 1, 1], [], []>} : vector<16x4xf32>, vector<4x256xf32>, vector<16x256xf32> -> vector<16x256xf32>
    %36 = arith.addf %25, %35 : vector<16x256xf32>
    %37 = vector.extract_strided_slice %31 {offsets = [4, 0], sizes = [4, 256], strides = [1, 1]} : vector<8x256xf32> to vector<4x256xf32>
    %cst_16 = arith.constant dense<0.000000e+00> : vector<16x256xf32>
    %38 = tpu.matmul %33, %37, %cst_16 {dimension_numbers = #tpu.dot_dimension_numbers<[1], [0], [0], [1], [0, 0, 1, 1], [], []>} : vector<16x4xf32>, vector<4x256xf32>, vector<16x256xf32> -> vector<16x256xf32>
    %39 = arith.addf %28, %38 : vector<16x256xf32>
    %c15_i32_17 = arith.constant 15 : i32
    %40 = tpu.dynamic_rotate %1 by %c15_i32_17 dim 1 : vector<8x256xf32>, i32 -> vector<8x256xf32>
    %41 = arith.andi %8, %14 : vector<8x256xi1>
    %cst_18 = arith.constant 0.000000e+00 : f32
    %42 = vector.broadcast %cst_18 : f32 to vector<8x256xf32>
    %43 = arith.select %41, %40, %42 : vector<8x256xi1>, vector<8x256xf32>
    %c2 = arith.constant 2 : index
    %c0_19 = arith.constant 0 : index
    %c0_20 = arith.constant 0 : index
    %44 = vector.load %arg2[%c2, %c0_19, %c0_20] : memref<9x16x4xf32, #tpu.memory_space<vmem>>, vector<1x16x4xf32>
    %45 = vector.shape_cast %44 : vector<1x16x4xf32> to vector<16x4xf32>
    %46 = vector.extract_strided_slice %43 {offsets = [0, 0], sizes = [4, 256], strides = [1, 1]} : vector<8x256xf32> to vector<4x256xf32>
    %cst_21 = arith.constant dense<0.000000e+00> : vector<16x256xf32>
    %47 = tpu.matmul %45, %46, %cst_21 {dimension_numbers = #tpu.dot_dimension_numbers<[1], [0], [0], [1], [0, 0, 1, 1], [], []>} : vector<16x4xf32>, vector<4x256xf32>, vector<16x256xf32> -> vector<16x256xf32>
    %48 = arith.addf %36, %47 : vector<16x256xf32>
    %49 = vector.extract_strided_slice %43 {offsets = [4, 0], sizes = [4, 256], strides = [1, 1]} : vector<8x256xf32> to vector<4x256xf32>
    %cst_22 = arith.constant dense<0.000000e+00> : vector<16x256xf32>
    %50 = tpu.matmul %45, %49, %cst_22 {dimension_numbers = #tpu.dot_dimension_numbers<[1], [0], [0], [1], [0, 0, 1, 1], [], []>} : vector<16x4xf32>, vector<4x256xf32>, vector<16x256xf32> -> vector<16x256xf32>
    %51 = arith.addf %39, %50 : vector<16x256xf32>
    %c1_i32_23 = arith.constant 1 : i32
    %52 = tpu.dynamic_rotate %1 by %c1_i32_23 dim 1 : vector<8x256xf32>, i32 -> vector<8x256xf32>
    %cst_24 = arith.constant 0.000000e+00 : f32
    %53 = vector.broadcast %cst_24 : f32 to vector<8x256xf32>
    %54 = arith.select %12, %52, %53 : vector<8x256xi1>, vector<8x256xf32>
    %c3 = arith.constant 3 : index
    %c0_25 = arith.constant 0 : index
    %c0_26 = arith.constant 0 : index
    %55 = vector.load %arg2[%c3, %c0_25, %c0_26] : memref<9x16x4xf32, #tpu.memory_space<vmem>>, vector<1x16x4xf32>
    %56 = vector.shape_cast %55 : vector<1x16x4xf32> to vector<16x4xf32>
    %57 = vector.extract_strided_slice %54 {offsets = [0, 0], sizes = [4, 256], strides = [1, 1]} : vector<8x256xf32> to vector<4x256xf32>
    %cst_27 = arith.constant dense<0.000000e+00> : vector<16x256xf32>
    %58 = tpu.matmul %56, %57, %cst_27 {dimension_numbers = #tpu.dot_dimension_numbers<[1], [0], [0], [1], [0, 0, 1, 1], [], []>} : vector<16x4xf32>, vector<4x256xf32>, vector<16x256xf32> -> vector<16x256xf32>
    %59 = arith.addf %48, %58 : vector<16x256xf32>
    %60 = vector.extract_strided_slice %54 {offsets = [4, 0], sizes = [4, 256], strides = [1, 1]} : vector<8x256xf32> to vector<4x256xf32>
    %cst_28 = arith.constant dense<0.000000e+00> : vector<16x256xf32>
    %61 = tpu.matmul %56, %60, %cst_28 {dimension_numbers = #tpu.dot_dimension_numbers<[1], [0], [0], [1], [0, 0, 1, 1], [], []>} : vector<16x4xf32>, vector<4x256xf32>, vector<16x256xf32> -> vector<16x256xf32>
    %62 = arith.addf %51, %61 : vector<16x256xf32>
    %c4 = arith.constant 4 : index
    %c0_29 = arith.constant 0 : index
    %c0_30 = arith.constant 0 : index
    %63 = vector.load %arg2[%c4, %c0_29, %c0_30] : memref<9x16x4xf32, #tpu.memory_space<vmem>>, vector<1x16x4xf32>
    %64 = vector.shape_cast %63 : vector<1x16x4xf32> to vector<16x4xf32>
    %65 = vector.extract_strided_slice %1 {offsets = [0, 0], sizes = [4, 256], strides = [1, 1]} : vector<8x256xf32> to vector<4x256xf32>
    %cst_31 = arith.constant dense<0.000000e+00> : vector<16x256xf32>
    %66 = tpu.matmul %64, %65, %cst_31 {dimension_numbers = #tpu.dot_dimension_numbers<[1], [0], [0], [1], [0, 0, 1, 1], [], []>} : vector<16x4xf32>, vector<4x256xf32>, vector<16x256xf32> -> vector<16x256xf32>
    %67 = arith.addf %59, %66 : vector<16x256xf32>
    %68 = vector.extract_strided_slice %1 {offsets = [4, 0], sizes = [4, 256], strides = [1, 1]} : vector<8x256xf32> to vector<4x256xf32>
    %cst_32 = arith.constant dense<0.000000e+00> : vector<16x256xf32>
    %69 = tpu.matmul %64, %68, %cst_32 {dimension_numbers = #tpu.dot_dimension_numbers<[1], [0], [0], [1], [0, 0, 1, 1], [], []>} : vector<16x4xf32>, vector<4x256xf32>, vector<16x256xf32> -> vector<16x256xf32>
    %70 = arith.addf %62, %69 : vector<16x256xf32>
    %c255_i32 = arith.constant 255 : i32
    %71 = tpu.dynamic_rotate %1 by %c255_i32 dim 1 : vector<8x256xf32>, i32 -> vector<8x256xf32>
    %cst_33 = arith.constant 0.000000e+00 : f32
    %72 = vector.broadcast %cst_33 : f32 to vector<8x256xf32>
    %73 = arith.select %14, %71, %72 : vector<8x256xi1>, vector<8x256xf32>
    %c5 = arith.constant 5 : index
    %c0_34 = arith.constant 0 : index
    %c0_35 = arith.constant 0 : index
    %74 = vector.load %arg2[%c5, %c0_34, %c0_35] : memref<9x16x4xf32, #tpu.memory_space<vmem>>, vector<1x16x4xf32>
    %75 = vector.shape_cast %74 : vector<1x16x4xf32> to vector<16x4xf32>
    %76 = vector.extract_strided_slice %73 {offsets = [0, 0], sizes = [4, 256], strides = [1, 1]} : vector<8x256xf32> to vector<4x256xf32>
    %cst_36 = arith.constant dense<0.000000e+00> : vector<16x256xf32>
    %77 = tpu.matmul %75, %76, %cst_36 {dimension_numbers = #tpu.dot_dimension_numbers<[1], [0], [0], [1], [0, 0, 1, 1], [], []>} : vector<16x4xf32>, vector<4x256xf32>, vector<16x256xf32> -> vector<16x256xf32>
    %78 = arith.addf %67, %77 : vector<16x256xf32>
    %79 = vector.extract_strided_slice %73 {offsets = [4, 0], sizes = [4, 256], strides = [1, 1]} : vector<8x256xf32> to vector<4x256xf32>
    %cst_37 = arith.constant dense<0.000000e+00> : vector<16x256xf32>
    %80 = tpu.matmul %75, %79, %cst_37 {dimension_numbers = #tpu.dot_dimension_numbers<[1], [0], [0], [1], [0, 0, 1, 1], [], []>} : vector<16x4xf32>, vector<4x256xf32>, vector<16x256xf32> -> vector<16x256xf32>
    %81 = arith.addf %70, %80 : vector<16x256xf32>
    %c241_i32 = arith.constant 241 : i32
    %82 = tpu.dynamic_rotate %1 by %c241_i32 dim 1 : vector<8x256xf32>, i32 -> vector<8x256xf32>
    %83 = arith.andi %10, %12 : vector<8x256xi1>
    %cst_38 = arith.constant 0.000000e+00 : f32
    %84 = vector.broadcast %cst_38 : f32 to vector<8x256xf32>
    %85 = arith.select %83, %82, %84 : vector<8x256xi1>, vector<8x256xf32>
    %c6 = arith.constant 6 : index
    %c0_39 = arith.constant 0 : index
    %c0_40 = arith.constant 0 : index
    %86 = vector.load %arg2[%c6, %c0_39, %c0_40] : memref<9x16x4xf32, #tpu.memory_space<vmem>>, vector<1x16x4xf32>
    %87 = vector.shape_cast %86 : vector<1x16x4xf32> to vector<16x4xf32>
    %88 = vector.extract_strided_slice %85 {offsets = [0, 0], sizes = [4, 256], strides = [1, 1]} : vector<8x256xf32> to vector<4x256xf32>
    %cst_41 = arith.constant dense<0.000000e+00> : vector<16x256xf32>
    %89 = tpu.matmul %87, %88, %cst_41 {dimension_numbers = #tpu.dot_dimension_numbers<[1], [0], [0], [1], [0, 0, 1, 1], [], []>} : vector<16x4xf32>, vector<4x256xf32>, vector<16x256xf32> -> vector<16x256xf32>
    %90 = arith.addf %78, %89 : vector<16x256xf32>
    %91 = vector.extract_strided_slice %85 {offsets = [4, 0], sizes = [4, 256], strides = [1, 1]} : vector<8x256xf32> to vector<4x256xf32>
    %cst_42 = arith.constant dense<0.000000e+00> : vector<16x256xf32>
    %92 = tpu.matmul %87, %91, %cst_42 {dimension_numbers = #tpu.dot_dimension_numbers<[1], [0], [0], [1], [0, 0, 1, 1], [], []>} : vector<16x4xf32>, vector<4x256xf32>, vector<16x256xf32> -> vector<16x256xf32>
    %93 = arith.addf %81, %92 : vector<16x256xf32>
    %c240_i32 = arith.constant 240 : i32
    %94 = tpu.dynamic_rotate %1 by %c240_i32 dim 1 : vector<8x256xf32>, i32 -> vector<8x256xf32>
    %cst_43 = arith.constant 0.000000e+00 : f32
    %95 = vector.broadcast %cst_43 : f32 to vector<8x256xf32>
    %96 = arith.select %10, %94, %95 : vector<8x256xi1>, vector<8x256xf32>
    %c7 = arith.constant 7 : index
    %c0_44 = arith.constant 0 : index
    %c0_45 = arith.constant 0 : index
    %97 = vector.load %arg2[%c7, %c0_44, %c0_45] : memref<9x16x4xf32, #tpu.memory_space<vmem>>, vector<1x16x4xf32>
    %98 = vector.shape_cast %97 : vector<1x16x4xf32> to vector<16x4xf32>
    %99 = vector.extract_strided_slice %96 {offsets = [0, 0], sizes = [4, 256], strides = [1, 1]} : vector<8x256xf32> to vector<4x256xf32>
    %cst_46 = arith.constant dense<0.000000e+00> : vector<16x256xf32>
    %100 = tpu.matmul %98, %99, %cst_46 {dimension_numbers = #tpu.dot_dimension_numbers<[1], [0], [0], [1], [0, 0, 1, 1], [], []>} : vector<16x4xf32>, vector<4x256xf32>, vector<16x256xf32> -> vector<16x256xf32>
    %101 = arith.addf %90, %100 : vector<16x256xf32>
    %102 = vector.extract_strided_slice %96 {offsets = [4, 0], sizes = [4, 256], strides = [1, 1]} : vector<8x256xf32> to vector<4x256xf32>
    %cst_47 = arith.constant dense<0.000000e+00> : vector<16x256xf32>
    %103 = tpu.matmul %98, %102, %cst_47 {dimension_numbers = #tpu.dot_dimension_numbers<[1], [0], [0], [1], [0, 0, 1, 1], [], []>} : vector<16x4xf32>, vector<4x256xf32>, vector<16x256xf32> -> vector<16x256xf32>
    %104 = arith.addf %93, %103 : vector<16x256xf32>
    %c239_i32 = arith.constant 239 : i32
    %105 = tpu.dynamic_rotate %1 by %c239_i32 dim 1 : vector<8x256xf32>, i32 -> vector<8x256xf32>
    %106 = arith.andi %10, %14 : vector<8x256xi1>
    %cst_48 = arith.constant 0.000000e+00 : f32
    %107 = vector.broadcast %cst_48 : f32 to vector<8x256xf32>
    %108 = arith.select %106, %105, %107 : vector<8x256xi1>, vector<8x256xf32>
    %c8 = arith.constant 8 : index
    %c0_49 = arith.constant 0 : index
    %c0_50 = arith.constant 0 : index
    %109 = vector.load %arg2[%c8, %c0_49, %c0_50] : memref<9x16x4xf32, #tpu.memory_space<vmem>>, vector<1x16x4xf32>
    %110 = vector.shape_cast %109 : vector<1x16x4xf32> to vector<16x4xf32>
    %111 = vector.extract_strided_slice %108 {offsets = [0, 0], sizes = [4, 256], strides = [1, 1]} : vector<8x256xf32> to vector<4x256xf32>
    %cst_51 = arith.constant dense<0.000000e+00> : vector<16x256xf32>
    %112 = tpu.matmul %110, %111, %cst_51 {dimension_numbers = #tpu.dot_dimension_numbers<[1], [0], [0], [1], [0, 0, 1, 1], [], []>} : vector<16x4xf32>, vector<4x256xf32>, vector<16x256xf32> -> vector<16x256xf32>
    %113 = arith.addf %101, %112 : vector<16x256xf32>
    %114 = vector.extract_strided_slice %108 {offsets = [4, 0], sizes = [4, 256], strides = [1, 1]} : vector<8x256xf32> to vector<4x256xf32>
    %cst_52 = arith.constant dense<0.000000e+00> : vector<16x256xf32>
    %115 = tpu.matmul %110, %114, %cst_52 {dimension_numbers = #tpu.dot_dimension_numbers<[1], [0], [0], [1], [0, 0, 1, 1], [], []>} : vector<16x4xf32>, vector<4x256xf32>, vector<16x256xf32> -> vector<16x256xf32>
    %116 = arith.addf %104, %115 : vector<16x256xf32>
    %c0_53 = arith.constant 0 : index
    %c0_54 = arith.constant 0 : index
    %117 = vector.load %arg3[%c0_53, %c0_54] : memref<16x1xf32, #tpu.memory_space<vmem>>, vector<16x1xf32>
    %118 = vector.broadcast %117 : vector<16x1xf32> to vector<16x256xf32>
    %119 = arith.addf %113, %118 : vector<16x256xf32>
    %120 = math.tanh %119 : vector<16x256xf32>
    %121 = vector.broadcast %117 : vector<16x1xf32> to vector<16x256xf32>
    %122 = arith.addf %116, %121 : vector<16x256xf32>
    %123 = math.tanh %122 : vector<16x256xf32>
    %124 = tpu.concatenate %120, %123 in 0 : vector<16x256xf32>, vector<16x256xf32> -> vector<32x256xf32>
    %c0_55 = arith.constant 0 : index
    %c0_56 = arith.constant 0 : index
    %c0_57 = arith.constant 0 : index
    %125 = vector.load %arg4[%c0_55, %c0_56, %c0_57] : memref<1x32x256xf32, #tpu.memory_space<vmem>>, vector<1x32x256xf32>
    %126 = vector.shape_cast %125 : vector<1x32x256xf32> to vector<32x256xf32>
    %127 = vector.shape_cast %124 : vector<32x256xf32> to vector<1x32x256xf32>
    tpu.vector_store %arg4[%c0_55, %c0_56, %c0_57], %127 {strides = array<i32>} : memref<1x32x256xf32, #tpu.memory_space<vmem>>, vector<1x32x256xf32>,
    return
  }
  func.func @transform_0(%arg0: i32) -> (i32, i32, i32) {
    %c0_i32 = arith.constant 0 : i32
    %c0_i32_0 = arith.constant 0 : i32
    %c0_i32_1 = arith.constant 0 : i32
    return %arg0, %c0_i32, %c0_i32_0 : i32, i32, i32
  }
  func.func @transform_1(%arg0: i32) -> (i32, i32, i32) {
    %c0_i32 = arith.constant 0 : i32
    %c0_i32_0 = arith.constant 0 : i32
    %c0_i32_1 = arith.constant 0 : i32
    %c0_i32_2 = arith.constant 0 : i32
    return %c0_i32, %c0_i32_0, %c0_i32_1 : i32, i32, i32
  }
  func.func @transform_2(%arg0: i32) -> (i32, i32) {
    %c0_i32 = arith.constant 0 : i32
    %c0_i32_0 = arith.constant 0 : i32
    %c0_i32_1 = arith.constant 0 : i32
    return %c0_i32, %c0_i32_0 : i32, i32
  }
  func.func @transform_3(%arg0: i32) -> (i32, i32, i32) {
    %c0_i32 = arith.constant 0 : i32
    %c0_i32_0 = arith.constant 0 : i32
    %c0_i32_1 = arith.constant 0 : i32
    return %arg0, %c0_i32, %c0_i32_0 : i32, i32, i32
  }
}

</mosaic_0001>

<llo_original>
// kernel: subpixel_conv.1
$region0: #{subpixel_conv.1}
  #allocation0 [shape = 'u32[]', space=smem, size = 0x4, offset = 0x4, fixed_abs, tag = 'smem constant byte address 0x4 - core index']
  #allocation1 [shape = 'u32[144,128]{1,0:T(1,128)}', space=vmem, size = 0x12000, scoped, tag = 'internal scratch']
  %s0 = inlined_call_operand.vmem [shape: f32[1,8,256], index: 0, kind: input, shape index: {}]
  %s1 = inlined_call_operand.vmem [shape: f32[9,16,4], index: 1, kind: input, shape index: {}]
  %s2 = inlined_call_operand.vmem [shape: f32[16,1], index: 2, kind: input, shape index: {}]
  %s3 = inlined_call_operand.vmem [shape: f32[1,32,256], index: 3, kind: output, shape index: {}]
  %s4 = sld [smem:[#allocation0]]
  $region22: #{subpixel_conv.1} parent=0
    _
  %s6 = ssub.s32 1, %s4
  %s7 = scalar_select 0, %s6, %s4
  // Predicated region
  $region2: #{subpixel_conv.1} parent=0 // pred_check
    _
  $region3: #{subpixel_conv.1} parent=0 // pred_check_branch
    %9 = sbr.rel (0) target = $region5
  $region4: #{subpixel_conv.1} parent=0 // pred_region
    _
  $region5: #{subpixel_conv.1} parent=0 // pred_fallthru
    _
  // Predicated region
  $region6: #{subpixel_conv.1} parent=0 // pred_check
    _
  $region7: #{subpixel_conv.1} parent=0 // pred_check_branch
    %11 = sbr.rel (0) target = $region9
  $region8: #{subpixel_conv.1} parent=0 // pred_region
    _
  $region9: #{subpixel_conv.1} parent=0 // pred_fallthru
    _
  // Predicated region
  $region10: #{subpixel_conv.1} parent=0 // pred_check
    _
  $region11: #{subpixel_conv.1} parent=0 // pred_check_branch
    %13 = sbr.rel (0) target = $region13
  $region12: #{subpixel_conv.1} parent=0 // pred_region
    _
  $region13: #{subpixel_conv.1} parent=0 // pred_fallthru
    _
  %v14 = vld [vmem:[%s0] sm:$0xff]
  %v15 = vld [vmem:[%s0 + $0x8] sm:$0xff]
  %v16 = vlaneseq
  %v17 = vand.u32 %v16, 127
  %v18 = vadd.s32 %v17, 128
  %v19 = vand.u32 %v17, 15
  %v20 = vand.u32 %v18, 15
  %v21 = vshra.s32 %v17, 4
  %v22 = vshra.s32 %v18, 4
  %vm23 = vcmp.ge.s32.totalorder %v21, 1
  %vm24 = vcmp.ge.s32.totalorder %v22, 1
  %vm25 = vcmp.lt.s32.totalorder %v21, 15
  %vm26 = vcmp.lt.s32.totalorder %v22, 15
  %vm27 = vcmp.ge.s32.totalorder %v19, 1
  %vm28 = vcmp.ge.s32.totalorder %v20, 1
  %vm29 = vcmp.lt.s32.totalorder %v19, 15
  %vm30 = vcmp.lt.s32.totalorder %v20, 15
  %31 = vrot.lane.b32.xlu0 %v14, 17
  %v32 = vpop.permute.xlu0 %31
  %33 = vrot.lane.b32.xlu0 %v15, 17
  %v34 = vpop.permute.xlu0 %33
  %vm35 = vcmp.lt.s32.totalorder %v17, 17
  %v36 = vsel %vm35, %v32, %v34
  %v37 = vsel %vm35, %v34, %v32
  %vm38 = vmand %vm23, %vm27
  %vm39 = vmand %vm24, %vm28
  %v40 = vsel %vm38, %v37, 0.0
  %v41 = vsel %vm39, %v36, 0.0
  %v42 = vld [vmem:[%s1] sm:$0xff]
  %v43 = vld [vmem:[%s1 + $0x8] sm:$0xff]
  %44 = vrot.lane.b32.xlu0 %v14, 16
  %v45 = vpop.permute.xlu0 %44
  %46 = vrot.lane.b32.xlu0 %v15, 16
  %v47 = vpop.permute.xlu0 %46
  %vm48 = vcmp.lt.s32.totalorder %v17, 16
  %v49 = vsel %vm48, %v45, %v47
  %v50 = vsel %vm48, %v47, %v45
  %v51 = vsel %vm23, %v50, 0.0
  %v52 = vsel %vm24, %v49, 0.0
  %s53 = scalar_lea.vmem %s1, 16
  %v54 = vld [vmem:[%s53] sm:$0xff]
  %v55 = vld [vmem:[%s53 + $0x8] sm:$0xff]
  %vm56 = vcmask 31744
  %v58 = vsel %vm56, %v54, 0
  %v61 = vsel %vm56, %v55, 0
  %vm63 = vcmask 1043456
  %v65 = vsel %vm63, %v51, 0
  %v68 = vsel %vm63, %v52, 0
  %70 = vmatprep.subr.mxu0 %v68
  %71 = vmatpush1.msra.mxu0 %v65
  %72 = vmatprep.subr.mxu0 0.0
  %73 = vmatpush1.msra.mxu0 0.0
  %74 = vmatprep.subr.mxu0 0.0
  %75 = vmatpush1.msra.mxu0 0.0
  %76 = vmatprep.subr.mxu0 0.0
  %77 = vmatpush1.msra.mxu0 0.0
  %78 = vmatprep.subr.mxu0 0.0
  %79 = vmatpush1.msra.mxu0 0.0
  %80 = vmatprep.subr.mxu0 0.0
  %81 = vmatpush1.msra.mxu0 0.0
  %82 = vmatprep.subr.mxu0 0.0
  %83 = vmatpush1.msra.mxu0 0.0
  %84 = vmatprep.subr.mxu0 0.0
  %85 = vmatpush1.msra.mxu0 0.0
  %86 = vmatprep.subr.mxu0 0.0
  %87 = vmatpush1.msra.mxu0 0.0
  %88 = vmatprep.subr.mxu0 0.0
  %89 = vmatpush1.msra.mxu0 0.0
  %90 = vmatprep.subr.mxu0 0.0
  %91 = vmatpush1.msra.mxu0 0.0
  %92 = vmatprep.subr.mxu0 0.0
  %93 = vmatpush1.msra.mxu0 0.0
  %94 = vmatprep.subr.mxu0 0.0
  %95 = vmatpush1.msra.mxu0 0.0
  %96 = vmatprep.subr.mxu0 0.0
  %97 = vmatpush1.msra.mxu0 0.0
  %98 = vmatprep.subr.mxu0 0.0
  %99 = vmatpush1.msra.mxu0 0.0
  %100 = vmatprep.subr.mxu0 0.0
  %101 = vmatpush1.msra.mxu0 0.0
  %102 = vmatprep.subr.mxu0 0.0
  %103 = vmatpush1.msra.mxu0 0.0
  %104 = vmatprep.subr.mxu0 0.0
  %105 = vmatpush1.msra.mxu0 0.0
  %106 = vmatprep.subr.mxu0 0.0
  %107 = vmatpush1.msra.mxu0 0.0
  %108 = vmatprep.subr.mxu0 0.0
  %109 = vmatpush1.msra.mxu0 0.0
  %110 = vmatprep.subr.mxu0 0.0
  %111 = vmatpush1.msra.mxu0 0.0
  %112 = vmatprep.subr.mxu0 0.0
  %113 = vmatpush1.msra.mxu0 0.0
  %114 = vmatprep.subr.mxu0 0.0
  %115 = vmatpush1.msra.mxu0 0.0
  %116 = vmatprep.subr.mxu0 0.0
  %117 = vmatpush1.msra.mxu0 0.0
  %118 = vmatprep.subr.mxu0 0.0
  %119 = vmatpush1.msra.mxu0 0.0
  %120 = vmatprep.subr.mxu0 0.0
  %121 = vmatpush1.msra.mxu0 0.0
  %122 = vmatprep.subr.mxu0 0.0
  %123 = vmatpush1.msra.mxu0 0.0
  %124 = vmatprep.subr.mxu0 0.0
  %125 = vmatpush1.msra.mxu0 0.0
  %126 = vmatprep.subr.mxu0 0.0
  %127 = vmatpush1.msra.mxu0 0.0
  %128 = vmatprep.subr.mxu0 0.0
  %129 = vmatpush1.msra.mxu0 0.0
  %130 = vmatprep.subr.mxu0 0.0
  %131 = vmatpush1.msra.mxu0 0.0
  %132 = vmatprep.subr.mxu0 0.0
  %133 = vmatpush1.msra.mxu0 0.0
  %134 = vmatprep.mubr.f32.mxu0 0.0
  %135 = vmatmul.mubr.f32.gmra.mrb[0].mxu0 %v58
  %v136 = vpop.f32.mrb[0].mxu0
  %v137 = vadd.f32 0.0, %v136
  %v138 = vpop.f32.mrb[0].mxu0
  %v139 = vadd.f32 0.0, %v138
  %140 = vmatprep.mubr.f32.mxu0 0.0
  %141 = vmatmul.mubr.f32.gmra.mrb[0].mxu0 %v61
  %v142 = vpop.f32.mrb[0].mxu0
  %v143 = vadd.f32 0.0, %v142
  %v144 = vpop.f32.mrb[0].mxu0
  %v145 = vadd.f32 0.0, %v144
  %146 = vdwg.mxu0
  %v148 = vsel %vm56, %v42, 0
  %v151 = vsel %vm56, %v43, 0
  %v154 = vsel %vm63, %v40, 0
  %v157 = vsel %vm63, %v41, 0
  %159 = vmatprep.subr.mxu0 %v157
  %160 = vmatpush1.msra.mxu0 %v154
  %161 = vmatprep.subr.mxu0 0.0
  %162 = vmatpush1.msra.mxu0 0.0
  %163 = vmatprep.subr.mxu0 0.0
  %164 = vmatpush1.msra.mxu0 0.0
  %165 = vmatprep.subr.mxu0 0.0
  %166 = vmatpush1.msra.mxu0 0.0
  %167 = vmatprep.subr.mxu0 0.0
  %168 = vmatpush1.msra.mxu0 0.0
  %169 = vmatprep.subr.mxu0 0.0
  %170 = vmatpush1.msra.mxu0 0.0
  %171 = vmatprep.subr.mxu0 0.0
  %172 = vmatpush1.msra.mxu0 0.0
  %173 = vmatprep.subr.mxu0 0.0
  %174 = vmatpush1.msra.mxu0 0.0
  %175 = vmatprep.subr.mxu0 0.0
  %176 = vmatpush1.msra.mxu0 0.0
  %177 = vmatprep.subr.mxu0 0.0
  %178 = vmatpush1.msra.mxu0 0.0
  %179 = vmatprep.subr.mxu0 0.0
  %180 = vmatpush1.msra.mxu0 0.0
  %181 = vmatprep.subr.mxu0 0.0
  %182 = vmatpush1.msra.mxu0 0.0
  %183 = vmatprep.subr.mxu0 0.0
  %184 = vmatpush1.msra.mxu0 0.0
  %185 = vmatprep.subr.mxu0 0.0
  %186 = vmatpush1.msra.mxu0 0.0
  %187 = vmatprep.subr.mxu0 0.0
  %188 = vmatpush1.msra.mxu0 0.0
  %189 = vmatprep.subr.mxu0 0.0
  %190 = vmatpush1.msra.mxu0 0.0
  %191 = vmatprep.subr.mxu0 0.0
  %192 = vmatpush1.msra.mxu0 0.0
  %193 = vmatprep.subr.mxu0 0.0
  %194 = vmatpush1.msra.mxu0 0.0
  %195 = vmatprep.subr.mxu0 0.0
  %196 = vmatpush1.msra.mxu0 0.0
  %197 = vmatprep.subr.mxu0 0.0
  %198 = vmatpush1.msra.mxu0 0.0
  %199 = vmatprep.subr.mxu0 0.0
  %200 = vmatpush1.msra.mxu0 0.0
  %201 = vmatprep.subr.mxu0 0.0
  %202 = vmatpush1.msra.mxu0 0.0
  %203 = vmatprep.subr.mxu0 0.0
  %204 = vmatpush1.msra.mxu0 0.0
  %205 = vmatprep.subr.mxu0 0.0
  %206 = vmatpush1.msra.mxu0 0.0
  %207 = vmatprep.subr.mxu0 0.0
  %208 = vmatpush1.msra.mxu0 0.0
  %209 = vmatprep.subr.mxu0 0.0
  %210 = vmatpush1.msra.mxu0 0.0
  %211 = vmatprep.subr.mxu0 0.0
  %212 = vmatpush1.msra.mxu0 0.0
  %213 = vmatprep.subr.mxu0 0.0
  %214 = vmatpush1.msra.mxu0 0.0
  %215 = vmatprep.subr.mxu0 0.0
  %216 = vmatpush1.msra.mxu0 0.0
  %217 = vmatprep.subr.mxu0 0.0
  %218 = vmatpush1.msra.mxu0 0.0
  %219 = vmatprep.subr.mxu0 0.0
  %220 = vmatpush1.msra.mxu0 0.0
  %221 = vmatprep.subr.mxu0 0.0
  %222 = vmatpush1.msra.mxu0 0.0
  %223 = vmatprep.mubr.f32.mxu0 0.0
  %224 = vmatmul.mubr.f32.gmra.mrb[0].mxu0 %v148
  %v225 = vpop.f32.mrb[0].mxu0
  %v226 = vadd.f32 %v137, %v225
  %v227 = vpop.f32.mrb[0].mxu0
  %v228 = vadd.f32 %v139, %v227
  %229 = vmatprep.mubr.f32.mxu0 0.0
  %230 = vmatmul.mubr.f32.gmra.mrb[0].mxu0 %v151
  %v231 = vpop.f32.mrb[0].mxu0
  %v232 = vadd.f32 %v143, %v231
  %v233 = vpop.f32.mrb[0].mxu0
  %v234 = vadd.f32 %v145, %v233
  %235 = vdwg.mxu0
  %v236 = vrot.slane %v51, 4
  %v237 = vrot.slane %v52, 4
  %v238 = vsel %vm63, %v236, 0
  %v240 = vsel %vm63, %v237, 0
  %242 = vmatprep.subr.mxu0 %v240
  %243 = vmatpush1.msra.mxu0 %v238
  %244 = vmatprep.subr.mxu0 0.0
  %245 = vmatpush1.msra.mxu0 0.0
  %246 = vmatprep.subr.mxu0 0.0
  %247 = vmatpush1.msra.mxu0 0.0
  %248 = vmatprep.subr.mxu0 0.0
  %249 = vmatpush1.msra.mxu0 0.0
  %250 = vmatprep.subr.mxu0 0.0
  %251 = vmatpush1.msra.mxu0 0.0
  %252 = vmatprep.subr.mxu0 0.0
  %253 = vmatpush1.msra.mxu0 0.0
  %254 = vmatprep.subr.mxu0 0.0
  %255 = vmatpush1.msra.mxu0 0.0
  %256 = vmatprep.subr.mxu0 0.0
  %257 = vmatpush1.msra.mxu0 0.0
  %258 = vmatprep.subr.mxu0 0.0
  %259 = vmatpush1.msra.mxu0 0.0
  %260 = vmatprep.subr.mxu0 0.0
  %261 = vmatpush1.msra.mxu0 0.0
  %262 = vmatprep.subr.mxu0 0.0
  %263 = vmatpush1.msra.mxu0 0.0
  %264 = vmatprep.subr.mxu0 0.0
  %265 = vmatpush1.msra.mxu0 0.0
  %266 = vmatprep.subr.mxu0 0.0
  %267 = vmatpush1.msra.mxu0 0.0
  %268 = vmatprep.subr.mxu0 0.0
  %269 = vmatpush1.msra.mxu0 0.0
  %270 = vmatprep.subr.mxu0 0.0
  %271 = vmatpush1.msra.mxu0 0.0
  %272 = vmatprep.subr.mxu0 0.0
  %273 = vmatpush1.msra.mxu0 0.0
  %274 = vmatprep.subr.mxu0 0.0
  %275 = vmatpush1.msra.mxu0 0.0
  %276 = vmatprep.subr.mxu0 0.0
  %277 = vmatpush1.msra.mxu0 0.0
  %278 = vmatprep.subr.mxu0 0.0
  %279 = vmatpush1.msra.mxu0 0.0
  %280 = vmatprep.subr.mxu0 0.0
  %281 = vmatpush1.msra.mxu0 0.0
  %282 = vmatprep.subr.mxu0 0.0
  %283 = vmatpush1.msra.mxu0 0.0
  %284 = vmatprep.subr.mxu0 0.0
  %285 = vmatpush1.msra.mxu0 0.0
  %286 = vmatprep.subr.mxu0 0.0
  %287 = vmatpush1.msra.mxu0 0.0
  %288 = vmatprep.subr.mxu0 0.0
  %289 = vmatpush1.msra.mxu0 0.0
  %290 = vmatprep.subr.mxu0 0.0
  %291 = vmatpush1.msra.mxu0 0.0
  %292 = vmatprep.subr.mxu0 0.0
  %293 = vmatpush1.msra.mxu0 0.0
  %294 = vmatprep.subr.mxu0 0.0
  %295 = vmatpush1.msra.mxu0 0.0
  %296 = vmatprep.subr.mxu0 0.0
  %297 = vmatpush1.msra.mxu0 0.0
  %298 = vmatprep.subr.mxu0 0.0
  %299 = vmatpush1.msra.mxu0 0.0
  %300 = vmatprep.subr.mxu0 0.0
  %301 = vmatpush1.msra.mxu0 0.0
  %302 = vmatprep.subr.mxu0 0.0
  %303 = vmatpush1.msra.mxu0 0.0
  %304 = vmatprep.subr.mxu0 0.0
  %305 = vmatpush1.msra.mxu0 0.0
  %306 = vmatprep.mubr.f32.mxu0 0.0
  %307 = vmatmul.mubr.f32.gmra.mrb[0].mxu0 %v58
  %v308 = vpop.f32.mrb[0].mxu0
  %v309 = vadd.f32 0.0, %v308
  %v310 = vpop.f32.mrb[0].mxu0
  %v311 = vadd.f32 0.0, %v310
  %312 = vmatprep.mubr.f32.mxu0 0.0
  %313 = vmatmul.mubr.f32.gmra.mrb[0].mxu0 %v61
  %v314 = vpop.f32.mrb[0].mxu0
  %v315 = vadd.f32 0.0, %v314
  %v316 = vpop.f32.mrb[0].mxu0
  %v317 = vadd.f32 0.0, %v316
  %318 = vdwg.mxu0
  %v319 = vrot.slane %v40, 4
  %v320 = vrot.slane %v41, 4
  %v321 = vsel %vm63, %v319, 0
  %v323 = vsel %vm63, %v320, 0
  %325 = vmatprep.subr.mxu0 %v323
  %326 = vmatpush1.msra.mxu0 %v321
  %327 = vmatprep.subr.mxu0 0.0
  %328 = vmatpush1.msra.mxu0 0.0
  %329 = vmatprep.subr.mxu0 0.0
  %330 = vmatpush1.msra.mxu0 0.0
  %331 = vmatprep.subr.mxu0 0.0
  %332 = vmatpush1.msra.mxu0 0.0
  %333 = vmatprep.subr.mxu0 0.0
  %334 = vmatpush1.msra.mxu0 0.0
  %335 = vmatprep.subr.mxu0 0.0
  %336 = vmatpush1.msra.mxu0 0.0
  %337 = vmatprep.subr.mxu0 0.0
  %338 = vmatpush1.msra.mxu0 0.0
  %339 = vmatprep.subr.mxu0 0.0
  %340 = vmatpush1.msra.mxu0 0.0
  %341 = vmatprep.subr.mxu0 0.0
  %342 = vmatpush1.msra.mxu0 0.0
  %343 = vmatprep.subr.mxu0 0.0
  %344 = vmatpush1.msra.mxu0 0.0
  %345 = vmatprep.subr.mxu0 0.0
  %346 = vmatpush1.msra.mxu0 0.0
  %347 = vmatprep.subr.mxu0 0.0
  %348 = vmatpush1.msra.mxu0 0.0
  %349 = vmatprep.subr.mxu0 0.0
  %350 = vmatpush1.msra.mxu0 0.0
  %351 = vmatprep.subr.mxu0 0.0
  %352 = vmatpush1.msra.mxu0 0.0
  %353 = vmatprep.subr.mxu0 0.0
  %354 = vmatpush1.msra.mxu0 0.0
  %355 = vmatprep.subr.mxu0 0.0
  %356 = vmatpush1.msra.mxu0 0.0
  %357 = vmatprep.subr.mxu0 0.0
  %358 = vmatpush1.msra.mxu0 0.0
  %359 = vmatprep.subr.mxu0 0.0
  %360 = vmatpush1.msra.mxu0 0.0
  %361 = vmatprep.subr.mxu0 0.0
  %362 = vmatpush1.msra.mxu0 0.0
  %363 = vmatprep.subr.mxu0 0.0
  %364 = vmatpush1.msra.mxu0 0.0
  %365 = vmatprep.subr.mxu0 0.0
  %366 = vmatpush1.msra.mxu0 0.0
  %367 = vmatprep.subr.mxu0 0.0
  %368 = vmatpush1.msra.mxu0 0.0
  %369 = vmatprep.subr.mxu0 0.0
  %370 = vmatpush1.msra.mxu0 0.0
  %371 = vmatprep.subr.mxu0 0.0
  %372 = vmatpush1.msra.mxu0 0.0
  %373 = vmatprep.subr.mxu0 0.0
  %374 = vmatpush1.msra.mxu0 0.0
  %375 = vmatprep.subr.mxu0 0.0
  %376 = vmatpush1.msra.mxu0 0.0
  %377 = vmatprep.subr.mxu0 0.0
  %378 = vmatpush1.msra.mxu0 0.0
  %379 = vmatprep.subr.mxu0 0.0
  %380 = vmatpush1.msra.mxu0 0.0
  %381 = vmatprep.subr.mxu0 0.0
  %382 = vmatpush1.msra.mxu0 0.0
  %383 = vmatprep.subr.mxu0 0.0
  %384 = vmatpush1.msra.mxu0 0.0
  %385 = vmatprep.subr.mxu0 0.0
  %386 = vmatpush1.msra.mxu0 0.0
  %387 = vmatprep.subr.mxu0 0.0
  %388 = vmatpush1.msra.mxu0 0.0
  %389 = vmatprep.mubr.f32.mxu0 0.0
  %390 = vmatmul.mubr.f32.gmra.mrb[0].mxu0 %v148
  %v391 = vpop.f32.mrb[0].mxu0
  %v392 = vadd.f32 %v309, %v391
  %v393 = vpop.f32.mrb[0].mxu0
  %v394 = vadd.f32 %v311, %v393
  %395 = vmatprep.mubr.f32.mxu0 0.0
  %396 = vmatmul.mubr.f32.gmra.mrb[0].mxu0 %v151
  %v397 = vpop.f32.mrb[0].mxu0
  %v398 = vadd.f32 %v315, %v397
  %v399 = vpop.f32.mrb[0].mxu0
  %v400 = vadd.f32 %v317, %v399
  %401 = vdwg.mxu0
  %402 = vrot.lane.b32.xlu0 %v14, 15
  %v403 = vpop.permute.xlu0 %402
  %404 = vrot.lane.b32.xlu0 %v15, 15
  %v405 = vpop.permute.xlu0 %404
  %vm406 = vcmp.lt.s32.totalorder %v17, 15
  %v407 = vsel %vm406, %v403, %v405
  %v408 = vsel %vm406, %v405, %v403
  %vm409 = vmand %vm23, %vm29
  %vm410 = vmand %vm24, %vm30
  %v411 = vsel %vm409, %v408, 0.0
  %v412 = vsel %vm410, %v407, 0.0
  %s413 = scalar_lea.vmem %s1, 32
  %v414 = vld [vmem:[%s413] sm:$0xff]
  %v415 = vld [vmem:[%s413 + $0x8] sm:$0xff]
  %v417 = vsel %vm56, %v414, 0
  %v420 = vsel %vm56, %v415, 0
  %v423 = vsel %vm63, %v411, 0
  %v426 = vsel %vm63, %v412, 0
  %428 = vmatprep.subr.mxu0 %v426
  %429 = vmatpush1.msra.mxu0 %v423
  %430 = vmatprep.subr.mxu0 0.0
  %431 = vmatpush1.msra.mxu0 0.0
  %432 = vmatprep.subr.mxu0 0.0
  %433 = vmatpush1.msra.mxu0 0.0
  %434 = vmatprep.subr.mxu0 0.0
  %435 = vmatpush1.msra.mxu0 0.0
  %436 = vmatprep.subr.mxu0 0.0
  %437 = vmatpush1.msra.mxu0 0.0
  %438 = vmatprep.subr.mxu0 0.0
  %439 = vmatpush1.msra.mxu0 0.0
  %440 = vmatprep.subr.mxu0 0.0
  %441 = vmatpush1.msra.mxu0 0.0
  %442 = vmatprep.subr.mxu0 0.0
  %443 = vmatpush1.msra.mxu0 0.0
  %444 = vmatprep.subr.mxu0 0.0
  %445 = vmatpush1.msra.mxu0 0.0
  %446 = vmatprep.subr.mxu0 0.0
  %447 = vmatpush1.msra.mxu0 0.0
  %448 = vmatprep.subr.mxu0 0.0
  %449 = vmatpush1.msra.mxu0 0.0
  %450 = vmatprep.subr.mxu0 0.0
  %451 = vmatpush1.msra.mxu0 0.0
  %452 = vmatprep.subr.mxu0 0.0
  %453 = vmatpush1.msra.mxu0 0.0
  %454 = vmatprep.subr.mxu0 0.0
  %455 = vmatpush1.msra.mxu0 0.0
  %456 = vmatprep.subr.mxu0 0.0
  %457 = vmatpush1.msra.mxu0 0.0
  %458 = vmatprep.subr.mxu0 0.0
  %459 = vmatpush1.msra.mxu0 0.0
  %460 = vmatprep.subr.mxu0 0.0
  %461 = vmatpush1.msra.mxu0 0.0
  %462 = vmatprep.subr.mxu0 0.0
  %463 = vmatpush1.msra.mxu0 0.0
  %464 = vmatprep.subr.mxu0 0.0
  %465 = vmatpush1.msra.mxu0 0.0
  %466 = vmatprep.subr.mxu0 0.0
  %467 = vmatpush1.msra.mxu0 0.0
  %468 = vmatprep.subr.mxu0 0.0
  %469 = vmatpush1.msra.mxu0 0.0
  %470 = vmatprep.subr.mxu0 0.0
  %471 = vmatpush1.msra.mxu0 0.0
  %472 = vmatprep.subr.mxu0 0.0
  %473 = vmatpush1.msra.mxu0 0.0
  %474 = vmatprep.subr.mxu0 0.0
  %475 = vmatpush1.msra.mxu0 0.0
  %476 = vmatprep.subr.mxu0 0.0
  %477 = vmatpush1.msra.mxu0 0.0
  %478 = vmatprep.subr.mxu0 0.0
  %479 = vmatpush1.msra.mxu0 0.0
  %480 = vmatprep.subr.mxu0 0.0
  %481 = vmatpush1.msra.mxu0 0.0
  %482 = vmatprep.subr.mxu0 0.0
  %483 = vmatpush1.msra.mxu0 0.0
  %484 = vmatprep.subr.mxu0 0.0
  %485 = vmatpush1.msra.mxu0 0.0
  %486 = vmatprep.subr.mxu0 0.0
  %487 = vmatpush1.msra.mxu0 0.0
  %488 = vmatprep.subr.mxu0 0.0
  %489 = vmatpush1.msra.mxu0 0.0
  %490 = vmatprep.subr.mxu0 0.0
  %491 = vmatpush1.msra.mxu0 0.0
  %492 = vmatprep.mubr.f32.mxu0 0.0
  %493 = vmatmul.mubr.f32.gmra.mrb[0].mxu0 %v417
  %v494 = vpop.f32.mrb[0].mxu0
  %v495 = vadd.f32 0.0, %v494
  %v496 = vpop.f32.mrb[0].mxu0
  %v497 = vadd.f32 0.0, %v496
  %498 = vmatprep.mubr.f32.mxu0 0.0
  %499 = vmatmul.mubr.f32.gmra.mrb[0].mxu0 %v420
  %v500 = vpop.f32.mrb[0].mxu0
  %v501 = vadd.f32 0.0, %v500
  %v502 = vpop.f32.mrb[0].mxu0
  %v503 = vadd.f32 0.0, %v502
  %504 = vdwg.mxu0
  %v505 = vadd.f32 %v226, %v495
  %v506 = vadd.f32 %v228, %v497
  %v507 = vadd.f32 %v232, %v501
  %v508 = vadd.f32 %v234, %v503
  %v509 = vrot.slane %v411, 4
  %v510 = vrot.slane %v412, 4
  %v511 = vsel %vm63, %v509, 0
  %v513 = vsel %vm63, %v510, 0
  %515 = vmatprep.subr.mxu0 %v513
  %516 = vmatpush1.msra.mxu0 %v511
  %517 = vmatprep.subr.mxu0 0.0
  %518 = vmatpush1.msra.mxu0 0.0
  %519 = vmatprep.subr.mxu0 0.0
  %520 = vmatpush1.msra.mxu0 0.0
  %521 = vmatprep.subr.mxu0 0.0
  %522 = vmatpush1.msra.mxu0 0.0
  %523 = vmatprep.subr.mxu0 0.0
  %524 = vmatpush1.msra.mxu0 0.0
  %525 = vmatprep.subr.mxu0 0.0
  %526 = vmatpush1.msra.mxu0 0.0
  %527 = vmatprep.subr.mxu0 0.0
  %528 = vmatpush1.msra.mxu0 0.0
  %529 = vmatprep.subr.mxu0 0.0
  %530 = vmatpush1.msra.mxu0 0.0
  %531 = vmatprep.subr.mxu0 0.0
  %532 = vmatpush1.msra.mxu0 0.0
  %533 = vmatprep.subr.mxu0 0.0
  %534 = vmatpush1.msra.mxu0 0.0
  %535 = vmatprep.subr.mxu0 0.0
  %536 = vmatpush1.msra.mxu0 0.0
  %537 = vmatprep.subr.mxu0 0.0
  %538 = vmatpush1.msra.mxu0 0.0
  %539 = vmatprep.subr.mxu0 0.0
  %540 = vmatpush1.msra.mxu0 0.0
  %541 = vmatprep.subr.mxu0 0.0
  %542 = vmatpush1.msra.mxu0 0.0
  %543 = vmatprep.subr.mxu0 0.0
  %544 = vmatpush1.msra.mxu0 0.0
  %545 = vmatprep.subr.mxu0 0.0
  %546 = vmatpush1.msra.mxu0 0.0
  %547 = vmatprep.subr.mxu0 0.0
  %548 = vmatpush1.msra.mxu0 0.0
  %549 = vmatprep.subr.mxu0 0.0
  %550 = vmatpush1.msra.mxu0 0.0
  %551 = vmatprep.subr.mxu0 0.0
  %552 = vmatpush1.msra.mxu0 0.0
  %553 = vmatprep.subr.mxu0 0.0
  %554 = vmatpush1.msra.mxu0 0.0
  %555 = vmatprep.subr.mxu0 0.0
  %556 = vmatpush1.msra.mxu0 0.0
  %557 = vmatprep.subr.mxu0 0.0
  %558 = vmatpush1.msra.mxu0 0.0
  %559 = vmatprep.subr.mxu0 0.0
  %560 = vmatpush1.msra.mxu0 0.0
  %561 = vmatprep.subr.mxu0 0.0
  %562 = vmatpush1.msra.mxu0 0.0
  %563 = vmatprep.subr.mxu0 0.0
  %564 = vmatpush1.msra.mxu0 0.0
  %565 = vmatprep.subr.mxu0 0.0
  %566 = vmatpush1.msra.mxu0 0.0
  %567 = vmatprep.subr.mxu0 0.0
  %568 = vmatpush1.msra.mxu0 0.0
  %569 = vmatprep.subr.mxu0 0.0
  %570 = vmatpush1.msra.mxu0 0.0
  %571 = vmatprep.subr.mxu0 0.0
  %572 = vmatpush1.msra.mxu0 0.0
  %573 = vmatprep.subr.mxu0 0.0
  %574 = vmatpush1.msra.mxu0 0.0
  %575 = vmatprep.subr.mxu0 0.0
  %576 = vmatpush1.msra.mxu0 0.0
  %577 = vmatprep.subr.mxu0 0.0
  %578 = vmatpush1.msra.mxu0 0.0
  %579 = vmatprep.mubr.f32.mxu0 0.0
  %580 = vmatmul.mubr.f32.gmra.mrb[0].mxu0 %v417
  %v581 = vpop.f32.mrb[0].mxu0
  %v582 = vadd.f32 0.0, %v581
  %v583 = vpop.f32.mrb[0].mxu0
  %v584 = vadd.f32 0.0, %v583
  %585 = vmatprep.mubr.f32.mxu0 0.0
  %586 = vmatmul.mubr.f32.gmra.mrb[0].mxu0 %v420
  %v587 = vpop.f32.mrb[0].mxu0
  %v588 = vadd.f32 0.0, %v587
  %v589 = vpop.f32.mrb[0].mxu0
  %v590 = vadd.f32 0.0, %v589
  %591 = vdwg.mxu0
  %v592 = vadd.f32 %v392, %v582
  %v593 = vadd.f32 %v394, %v584
  %v594 = vadd.f32 %v398, %v588
  %v595 = vadd.f32 %v400, %v590
  %596 = vrot.lane.b32.xlu0 %v14, 1
  %v597 = vpop.permute.xlu0 %596
  %598 = vrot.lane.b32.xlu0 %v15, 1
  %v599 = vpop.permute.xlu0 %598
  %vm600 = vcmp.lt.s32.totalorder %v17, 1
  %v601 = vsel %vm600, %v597, %v599
  %v602 = vsel %vm600, %v599, %v597
  %v603 = vsel %vm27, %v602, 0.0
  %v604 = vsel %vm28, %v601, 0.0
  %s605 = scalar_lea.vmem %s1, 48
  %v606 = vld [vmem:[%s605] sm:$0xff]
  %v607 = vld [vmem:[%s605 + $0x8] sm:$0xff]
  %v609 = vsel %vm56, %v606, 0
  %v612 = vsel %vm56, %v607, 0
  %v615 = vsel %vm63, %v603, 0
  %v618 = vsel %vm63, %v604, 0
  %620 = vmatprep.subr.mxu0 %v618
  %621 = vmatpush1.msra.mxu0 %v615
  %622 = vmatprep.subr.mxu0 0.0
  %623 = vmatpush1.msra.mxu0 0.0
  %624 = vmatprep.subr.mxu0 0.0
  %625 = vmatpush1.msra.mxu0 0.0
  %626 = vmatprep.subr.mxu0 0.0
  %627 = vmatpush1.msra.mxu0 0.0
  %628 = vmatprep.subr.mxu0 0.0
  %629 = vmatpush1.msra.mxu0 0.0
  %630 = vmatprep.subr.mxu0 0.0
  %631 = vmatpush1.msra.mxu0 0.0
  %632 = vmatprep.subr.mxu0 0.0
  %633 = vmatpush1.msra.mxu0 0.0
  %634 = vmatprep.subr.mxu0 0.0
  %635 = vmatpush1.msra.mxu0 0.0
  %636 = vmatprep.subr.mxu0 0.0
  %637 = vmatpush1.msra.mxu0 0.0
  %638 = vmatprep.subr.mxu0 0.0
  %639 = vmatpush1.msra.mxu0 0.0
  %640 = vmatprep.subr.mxu0 0.0
  %641 = vmatpush1.msra.mxu0 0.0
  %642 = vmatprep.subr.mxu0 0.0
  %643 = vmatpush1.msra.mxu0 0.0
  %644 = vmatprep.subr.mxu0 0.0
  %645 = vmatpush1.msra.mxu0 0.0
  %646 = vmatprep.subr.mxu0 0.0
  %647 = vmatpush1.msra.mxu0 0.0
  %648 = vmatprep.subr.mxu0 0.0
  %649 = vmatpush1.msra.mxu0 0.0
  %650 = vmatprep.subr.mxu0 0.0
  %651 = vmatpush1.msra.mxu0 0.0
  %652 = vmatprep.subr.mxu0 0.0
  %653 = vmatpush1.msra.mxu0 0.0
  %654 = vmatprep.subr.mxu0 0.0
  %655 = vmatpush1.msra.mxu0 0.0
  %656 = vmatprep.subr.mxu0 0.0
  %657 = vmatpush1.msra.mxu0 0.0
  %658 = vmatprep.subr.mxu0 0.0
  %659 = vmatpush1.msra.mxu0 0.0
  %660 = vmatprep.subr.mxu0 0.0
  %661 = vmatpush1.msra.mxu0 0.0
  %662 = vmatprep.subr.mxu0 0.0
  %663 = vmatpush1.msra.mxu0 0.0
  %664 = vmatprep.subr.mxu0 0.0
  %665 = vmatpush1.msra.mxu0 0.0
  %666 = vmatprep.subr.mxu0 0.0
  %667 = vmatpush1.msra.mxu0 0.0
  %668 = vmatprep.subr.mxu0 0.0
  %669 = vmatpush1.msra.mxu0 0.0
  %670 = vmatprep.subr.mxu0 0.0
  %671 = vmatpush1.msra.mxu0 0.0
  %672 = vmatprep.subr.mxu0 0.0
  %673 = vmatpush1.msra.mxu0 0.0
  %674 = vmatprep.subr.mxu0 0.0
  %675 = vmatpush1.msra.mxu0 0.0
  %676 = vmatprep.subr.mxu0 0.0
  %677 = vmatpush1.msra.mxu0 0.0
  %678 = vmatprep.subr.mxu0 0.0
  %679 = vmatpush1.msra.mxu0 0.0
  %680 = vmatprep.subr.mxu0 0.0
  %681 = vmatpush1.msra.mxu0 0.0
  %682 = vmatprep.subr.mxu0 0.0
  %683 = vmatpush1.msra.mxu0 0.0
  %684 = vmatprep.mubr.f32.mxu0 0.0
  %685 = vmatmul.mubr.f32.gmra.mrb[0].mxu0 %v609
  %v686 = vpop.f32.mrb[0].mxu0
  %v687 = vadd.f32 0.0, %v686
  %v688 = vpop.f32.mrb[0].mxu0
  %v689 = vadd.f32 0.0, %v688
  %690 = vmatprep.mubr.f32.mxu0 0.0
  %691 = vmatmul.mubr.f32.gmra.mrb[0].mxu0 %v612
  %v692 = vpop.f32.mrb[0].mxu0
  %v693 = vadd.f32 0.0, %v692
  %v694 = vpop.f32.mrb[0].mxu0
  %v695 = vadd.f32 0.0, %v694
  %696 = vdwg.mxu0
  %v697 = vadd.f32 %v505, %v687
  %v698 = vadd.f32 %v506, %v689
  %v699 = vadd.f32 %v507, %v693
  %v700 = vadd.f32 %v508, %v695
  %v701 = vrot.slane %v603, 4
  %v702 = vrot.slane %v604, 4
  %v703 = vsel %vm63, %v701, 0
  %v705 = vsel %vm63, %v702, 0
  %707 = vmatprep.subr.mxu0 %v705
  %708 = vmatpush1.msra.mxu0 %v703
  %709 = vmatprep.subr.mxu0 0.0
  %710 = vmatpush1.msra.mxu0 0.0
  %711 = vmatprep.subr.mxu0 0.0
  %712 = vmatpush1.msra.mxu0 0.0
  %713 = vmatprep.subr.mxu0 0.0
  %714 = vmatpush1.msra.mxu0 0.0
  %715 = vmatprep.subr.mxu0 0.0
  %716 = vmatpush1.msra.mxu0 0.0
  %717 = vmatprep.subr.mxu0 0.0
  %718 = vmatpush1.msra.mxu0 0.0
  %719 = vmatprep.subr.mxu0 0.0
  %720 = vmatpush1.msra.mxu0 0.0
  %721 = vmatprep.subr.mxu0 0.0
  %722 = vmatpush1.msra.mxu0 0.0
  %723 = vmatprep.subr.mxu0 0.0
  %724 = vmatpush1.msra.mxu0 0.0
  %725 = vmatprep.subr.mxu0 0.0
  %726 = vmatpush1.msra.mxu0 0.0
  %727 = vmatprep.subr.mxu0 0.0
  %728 = vmatpush1.msra.mxu0 0.0
  %729 = vmatprep.subr.mxu0 0.0
  %730 = vmatpush1.msra.mxu0 0.0
  %731 = vmatprep.subr.mxu0 0.0
  %732 = vmatpush1.msra.mxu0 0.0
  %733 = vmatprep.subr.mxu0 0.0
  %734 = vmatpush1.msra.mxu0 0.0
  %735 = vmatprep.subr.mxu0 0.0
  %736 = vmatpush1.msra.mxu0 0.0
  %737 = vmatprep.subr.mxu0 0.0
  %738 = vmatpush1.msra.mxu0 0.0
  %739 = vmatprep.subr.mxu0 0.0
  %740 = vmatpush1.msra.mxu0 0.0
  %741 = vmatprep.subr.mxu0 0.0
  %742 = vmatpush1.msra.mxu0 0.0
  %743 = vmatprep.subr.mxu0 0.0
  %744 = vmatpush1.msra.mxu0 0.0
  %745 = vmatprep.subr.mxu0 0.0
  %746 = vmatpush1.msra.mxu0 0.0
  %747 = vmatprep.subr.mxu0 0.0
  %748 = vmatpush1.msra.mxu0 0.0
  %749 = vmatprep.subr.mxu0 0.0
  %750 = vmatpush1.msra.mxu0 0.0
  %751 = vmatprep.subr.mxu0 0.0
  %752 = vmatpush1.msra.mxu0 0.0
  %753 = vmatprep.subr.mxu0 0.0
  %754 = vmatpush1.msra.mxu0 0.0
  %755 = vmatprep.subr.mxu0 0.0
  %756 = vmatpush1.msra.mxu0 0.0
  %757 = vmatprep.subr.mxu0 0.0
  %758 = vmatpush1.msra.mxu0 0.0
  %759 = vmatprep.subr.mxu0 0.0
  %760 = vmatpush1.msra.mxu0 0.0
  %761 = vmatprep.subr.mxu0 0.0
  %762 = vmatpush1.msra.mxu0 0.0
  %763 = vmatprep.subr.mxu0 0.0
  %764 = vmatpush1.msra.mxu0 0.0
  %765 = vmatprep.subr.mxu0 0.0
  %766 = vmatpush1.msra.mxu0 0.0
  %767 = vmatprep.subr.mxu0 0.0
  %768 = vmatpush1.msra.mxu0 0.0
  %769 = vmatprep.subr.mxu0 0.0
  %770 = vmatpush1.msra.mxu0 0.0
  %771 = vmatprep.mubr.f32.mxu0 0.0
  %772 = vmatmul.mubr.f32.gmra.mrb[0].mxu0 %v609
  %v773 = vpop.f32.mrb[0].mxu0
  %v774 = vadd.f32 0.0, %v773
  %v775 = vpop.f32.mrb[0].mxu0
  %v776 = vadd.f32 0.0, %v775
  %777 = vmatprep.mubr.f32.mxu0 0.0
  %778 = vmatmul.mubr.f32.gmra.mrb[0].mxu0 %v612
  %v779 = vpop.f32.mrb[0].mxu0
  %v780 = vadd.f32 0.0, %v779
  %v781 = vpop.f32.mrb[0].mxu0
  %v782 = vadd.f32 0.0, %v781
  %783 = vdwg.mxu0
  %v784 = vadd.f32 %v592, %v774
  %v785 = vadd.f32 %v593, %v776
  %v786 = vadd.f32 %v594, %v780
  %v787 = vadd.f32 %v595, %v782
  %s788 = scalar_lea.vmem %s1, 64
  %v789 = vld [vmem:[%s788] sm:$0xff]
  %v790 = vld [vmem:[%s788 + $0x8] sm:$0xff]
  %v792 = vsel %vm56, %v789, 0
  %v795 = vsel %vm56, %v790, 0
  %v798 = vsel %vm63, %v14, 0
  %v801 = vsel %vm63, %v15, 0
  %803 = vmatprep.subr.mxu0 %v801
  %804 = vmatpush1.msra.mxu0 %v798
  %805 = vmatprep.subr.mxu0 0.0
  %806 = vmatpush1.msra.mxu0 0.0
  %807 = vmatprep.subr.mxu0 0.0
  %808 = vmatpush1.msra.mxu0 0.0
  %809 = vmatprep.subr.mxu0 0.0
  %810 = vmatpush1.msra.mxu0 0.0
  %811 = vmatprep.subr.mxu0 0.0
  %812 = vmatpush1.msra.mxu0 0.0
  %813 = vmatprep.subr.mxu0 0.0
  %814 = vmatpush1.msra.mxu0 0.0
  %815 = vmatprep.subr.mxu0 0.0
  %816 = vmatpush1.msra.mxu0 0.0
  %817 = vmatprep.subr.mxu0 0.0
  %818 = vmatpush1.msra.mxu0 0.0
  %819 = vmatprep.subr.mxu0 0.0
  %820 = vmatpush1.msra.mxu0 0.0
  %821 = vmatprep.subr.mxu0 0.0
  %822 = vmatpush1.msra.mxu0 0.0
  %823 = vmatprep.subr.mxu0 0.0
  %824 = vmatpush1.msra.mxu0 0.0
  %825 = vmatprep.subr.mxu0 0.0
  %826 = vmatpush1.msra.mxu0 0.0
  %827 = vmatprep.subr.mxu0 0.0
  %828 = vmatpush1.msra.mxu0 0.0
  %829 = vmatprep.subr.mxu0 0.0
  %830 = vmatpush1.msra.mxu0 0.0
  %831 = vmatprep.subr.mxu0 0.0
  %832 = vmatpush1.msra.mxu0 0.0
  %833 = vmatprep.subr.mxu0 0.0
  %834 = vmatpush1.msra.mxu0 0.0
  %835 = vmatprep.subr.mxu0 0.0
  %836 = vmatpush1.msra.mxu0 0.0
  %837 = vmatprep.subr.mxu0 0.0
  %838 = vmatpush1.msra.mxu0 0.0
  %839 = vmatprep.subr.mxu0 0.0
  %840 = vmatpush1.msra.mxu0 0.0
  %841 = vmatprep.subr.mxu0 0.0
  %842 = vmatpush1.msra.mxu0 0.0
  %843 = vmatprep.subr.mxu0 0.0
  %844 = vmatpush1.msra.mxu0 0.0
  %845 = vmatprep.subr.mxu0 0.0
  %846 = vmatpush1.msra.mxu0 0.0
  %847 = vmatprep.subr.mxu0 0.0
  %848 = vmatpush1.msra.mxu0 0.0
  %849 = vmatprep.subr.mxu0 0.0
  %850 = vmatpush1.msra.mxu0 0.0
  %851 = vmatprep.subr.mxu0 0.0
  %852 = vmatpush1.msra.mxu0 0.0
  %853 = vmatprep.subr.mxu0 0.0
  %854 = vmatpush1.msra.mxu0 0.0
  %855 = vmatprep.subr.mxu0 0.0
  %856 = vmatpush1.msra.mxu0 0.0
  %857 = vmatprep.subr.mxu0 0.0
  %858 = vmatpush1.msra.mxu0 0.0
  %859 = vmatprep.subr.mxu0 0.0
  %860 = vmatpush1.msra.mxu0 0.0
  %861 = vmatprep.subr.mxu0 0.0
  %862 = vmatpush1.msra.mxu0 0.0
  %863 = vmatprep.subr.mxu0 0.0
  %864 = vmatpush1.msra.mxu0 0.0
  %865 = vmatprep.subr.mxu0 0.0
  %866 = vmatpush1.msra.mxu0 0.0
  %867 = vmatprep.mubr.f32.mxu0 0.0
  %868 = vmatmul.mubr.f32.gmra.mrb[0].mxu0 %v792
  %v869 = vpop.f32.mrb[0].mxu0
  %v870 = vadd.f32 0.0, %v869
  %v871 = vpop.f32.mrb[0].mxu0
  %v872 = vadd.f32 0.0, %v871
  %873 = vmatprep.mubr.f32.mxu0 0.0
  %874 = vmatmul.mubr.f32.gmra.mrb[0].mxu0 %v795
  %v875 = vpop.f32.mrb[0].mxu0
  %v876 = vadd.f32 0.0, %v875
  %v877 = vpop.f32.mrb[0].mxu0
  %v878 = vadd.f32 0.0, %v877
  %879 = vdwg.mxu0
  %v880 = vadd.f32 %v697, %v870
  %v881 = vadd.f32 %v698, %v872
  %v882 = vadd.f32 %v699, %v876
  %v883 = vadd.f32 %v700, %v878
  %v884 = vrot.slane %v14, 4
  %v885 = vrot.slane %v15, 4
  %v886 = vsel %vm63, %v884, 0
  %v888 = vsel %vm63, %v885, 0
  %890 = vmatprep.subr.mxu0 %v888
  %891 = vmatpush1.msra.mxu0 %v886
  %892 = vmatprep.subr.mxu0 0.0
  %893 = vmatpush1.msra.mxu0 0.0
  %894 = vmatprep.subr.mxu0 0.0
  %895 = vmatpush1.msra.mxu0 0.0
  %896 = vmatprep.subr.mxu0 0.0
  %897 = vmatpush1.msra.mxu0 0.0
  %898 = vmatprep.subr.mxu0 0.0
  %899 = vmatpush1.msra.mxu0 0.0
  %900 = vmatprep.subr.mxu0 0.0
  %901 = vmatpush1.msra.mxu0 0.0
  %902 = vmatprep.subr.mxu0 0.0
  %903 = vmatpush1.msra.mxu0 0.0
  %904 = vmatprep.subr.mxu0 0.0
  %905 = vmatpush1.msra.mxu0 0.0
  %906 = vmatprep.subr.mxu0 0.0
  %907 = vmatpush1.msra.mxu0 0.0
  %908 = vmatprep.subr.mxu0 0.0
  %909 = vmatpush1.msra.mxu0 0.0
  %910 = vmatprep.subr.mxu0 0.0
  %911 = vmatpush1.msra.mxu0 0.0
  %912 = vmatprep.subr.mxu0 0.0
  %913 = vmatpush1.msra.mxu0 0.0
  %914 = vmatprep.subr.mxu0 0.0
  %915 = vmatpush1.msra.mxu0 0.0
  %916 = vmatprep.subr.mxu0 0.0
  %917 = vmatpush1.msra.mxu0 0.0
  %918 = vmatprep.subr.mxu0 0.0
  %919 = vmatpush1.msra.mxu0 0.0
  %920 = vmatprep.subr.mxu0 0.0
  %921 = vmatpush1.msra.mxu0 0.0
  %922 = vmatprep.subr.mxu0 0.0
  %923 = vmatpush1.msra.mxu0 0.0
  %924 = vmatprep.subr.mxu0 0.0
  %925 = vmatpush1.msra.mxu0 0.0
  %926 = vmatprep.subr.mxu0 0.0
  %927 = vmatpush1.msra.mxu0 0.0
  %928 = vmatprep.subr.mxu0 0.0
  %929 = vmatpush1.msra.mxu0 0.0
  %930 = vmatprep.subr.mxu0 0.0
  %931 = vmatpush1.msra.mxu0 0.0
  %932 = vmatprep.subr.mxu0 0.0
  %933 = vmatpush1.msra.mxu0 0.0
  %934 = vmatprep.subr.mxu0 0.0
  %935 = vmatpush1.msra.mxu0 0.0
  %936 = vmatprep.subr.mxu0 0.0
  %937 = vmatpush1.msra.mxu0 0.0
  %938 = vmatprep.subr.mxu0 0.0
  %939 = vmatpush1.msra.mxu0 0.0
  %940 = vmatprep.subr.mxu0 0.0
  %941 = vmatpush1.msra.mxu0 0.0
  %942 = vmatprep.subr.mxu0 0.0
  %943 = vmatpush1.msra.mxu0 0.0
  %944 = vmatprep.subr.mxu0 0.0
  %945 = vmatpush1.msra.mxu0 0.0
  %946 = vmatprep.subr.mxu0 0.0
  %947 = vmatpush1.msra.mxu0 0.0
  %948 = vmatprep.subr.mxu0 0.0
  %949 = vmatpush1.msra.mxu0 0.0
  %950 = vmatprep.subr.mxu0 0.0
  %951 = vmatpush1.msra.mxu0 0.0
  %952 = vmatprep.subr.mxu0 0.0
  %953 = vmatpush1.msra.mxu0 0.0
  %954 = vmatprep.mubr.f32.mxu0 0.0
  %955 = vmatmul.mubr.f32.gmra.mrb[0].mxu0 %v792
  %v956 = vpop.f32.mrb[0].mxu0
  %v957 = vadd.f32 0.0, %v956
  %v958 = vpop.f32.mrb[0].mxu0
  %v959 = vadd.f32 0.0, %v958
  %960 = vmatprep.mubr.f32.mxu0 0.0
  %961 = vmatmul.mubr.f32.gmra.mrb[0].mxu0 %v795
  %v962 = vpop.f32.mrb[0].mxu0
  %v963 = vadd.f32 0.0, %v962
  %v964 = vpop.f32.mrb[0].mxu0
  %v965 = vadd.f32 0.0, %v964
  %966 = vdwg.mxu0
  %v967 = vadd.f32 %v784, %v957
  %v968 = vadd.f32 %v785, %v959
  %v969 = vadd.f32 %v786, %v963
  %v970 = vadd.f32 %v787, %v965
  %971 = vrot.lane.b32.xlu0 %v14, 127
  %v972 = vpop.permute.xlu0 %971
  %973 = vrot.lane.b32.xlu0 %v15, 127
  %v974 = vpop.permute.xlu0 %973
  %vm975 = vcmp.lt.s32.totalorder %v17, 127
  %v976 = vsel %vm975, %v972, %v974
  %v977 = vsel %vm975, %v974, %v972
  %v978 = vsel %vm29, %v976, 0.0
  %v979 = vsel %vm30, %v977, 0.0
  %s980 = scalar_lea.vmem %s1, 80
  %v981 = vld [vmem:[%s980] sm:$0xff]
  %v982 = vld [vmem:[%s980 + $0x8] sm:$0xff]
  %v984 = vsel %vm56, %v981, 0
  %v987 = vsel %vm56, %v982, 0
  %v990 = vsel %vm63, %v978, 0
  %v993 = vsel %vm63, %v979, 0
  %995 = vmatprep.subr.mxu0 %v993
  %996 = vmatpush1.msra.mxu0 %v990
  %997 = vmatprep.subr.mxu0 0.0
  %998 = vmatpush1.msra.mxu0 0.0
  %999 = vmatprep.subr.mxu0 0.0
  %1000 = vmatpush1.msra.mxu0 0.0
  %1001 = vmatprep.subr.mxu0 0.0
  %1002 = vmatpush1.msra.mxu0 0.0
  %1003 = vmatprep.subr.mxu0 0.0
  %1004 = vmatpush1.msra.mxu0 0.0
  %1005 = vmatprep.subr.mxu0 0.0
  %1006 = vmatpush1.msra.mxu0 0.0
  %1007 = vmatprep.subr.mxu0 0.0
  %1008 = vmatpush1.msra.mxu0 0.0
  %1009 = vmatprep.subr.mxu0 0.0
  %1010 = vmatpush1.msra.mxu0 0.0
  %1011 = vmatprep.subr.mxu0 0.0
  %1012 = vmatpush1.msra.mxu0 0.0
  %1013 = vmatprep.subr.mxu0 0.0
  %1014 = vmatpush1.msra.mxu0 0.0
  %1015 = vmatprep.subr.mxu0 0.0
  %1016 = vmatpush1.msra.mxu0 0.0
  %1017 = vmatprep.subr.mxu0 0.0
  %1018 = vmatpush1.msra.mxu0 0.0
  %1019 = vmatprep.subr.mxu0 0.0
  %1020 = vmatpush1.msra.mxu0 0.0
  %1021 = vmatprep.subr.mxu0 0.0
  %1022 = vmatpush1.msra.mxu0 0.0
  %1023 = vmatprep.subr.mxu0 0.0
  %1024 = vmatpush1.msra.mxu0 0.0
  %1025 = vmatprep.subr.mxu0 0.0
  %1026 = vmatpush1.msra.mxu0 0.0
  %1027 = vmatprep.subr.mxu0 0.0
  %1028 = vmatpush1.msra.mxu0 0.0
  %1029 = vmatprep.subr.mxu0 0.0
  %1030 = vmatpush1.msra.mxu0 0.0
  %1031 = vmatprep.subr.mxu0 0.0
  %1032 = vmatpush1.msra.mxu0 0.0
  %1033 = vmatprep.subr.mxu0 0.0
  %1034 = vmatpush1.msra.mxu0 0.0
  %1035 = vmatprep.subr.mxu0 0.0
  %1036 = vmatpush1.msra.mxu0 0.0
  %1037 = vmatprep.subr.mxu0 0.0
  %1038 = vmatpush1.msra.mxu0 0.0
  %1039 = vmatprep.subr.mxu0 0.0
  %1040 = vmatpush1.msra.mxu0 0.0
  %1041 = vmatprep.subr.mxu0 0.0
  %1042 = vmatpush1.msra.mxu0 0.0
  %1043 = vmatprep.subr.mxu0 0.0
  %1044 = vmatpush1.msra.mxu0 0.0
  %1045 = vmatprep.subr.mxu0 0.0
  %1046 = vmatpush1.msra.mxu0 0.0
  %1047 = vmatprep.subr.mxu0 0.0
  %1048 = vmatpush1.msra.mxu0 0.0
  %1049 = vmatprep.subr.mxu0 0.0
  %1050 = vmatpush1.msra.mxu0 0.0
  %1051 = vmatprep.subr.mxu0 0.0
  %1052 = vmatpush1.msra.mxu0 0.0
  %1053 = vmatprep.subr.mxu0 0.0
  %1054 = vmatpush1.msra.mxu0 0.0
  %1055 = vmatprep.subr.mxu0 0.0
  %1056 = vmatpush1.msra.mxu0 0.0
  %1057 = vmatprep.subr.mxu0 0.0
  %1058 = vmatpush1.msra.mxu0 0.0
  %1059 = vmatprep.mubr.f32.mxu0 0.0
  %1060 = vmatmul.mubr.f32.gmra.mrb[0].mxu0 %v984
  %v1061 = vpop.f32.mrb[0].mxu0
  %v1062 = vadd.f32 0.0, %v1061
  %v1063 = vpop.f32.mrb[0].mxu0
  %v1064 = vadd.f32 0.0, %v1063
  %1065 = vmatprep.mubr.f32.mxu0 0.0
  %1066 = vmatmul.mubr.f32.gmra.mrb[0].mxu0 %v987
  %v1067 = vpop.f32.mrb[0].mxu0
  %v1068 = vadd.f32 0.0, %v1067
  %v1069 = vpop.f32.mrb[0].mxu0
  %v1070 = vadd.f32 0.0, %v1069
  %1071 = vdwg.mxu0
  %v1072 = vadd.f32 %v880, %v1062
  %v1073 = vadd.f32 %v881, %v1064
  %v1074 = vadd.f32 %v882, %v1068
  %v1075 = vadd.f32 %v883, %v1070
  %v1076 = vrot.slane %v978, 4
  %v1077 = vrot.slane %v979, 4
  %v1078 = vsel %vm63, %v1076, 0
  %v1080 = vsel %vm63, %v1077, 0
  %1082 = vmatprep.subr.mxu0 %v1080
  %1083 = vmatpush1.msra.mxu0 %v1078
  %1084 = vmatprep.subr.mxu0 0.0
  %1085 = vmatpush1.msra.mxu0 0.0
  %1086 = vmatprep.subr.mxu0 0.0
  %1087 = vmatpush1.msra.mxu0 0.0
  %1088 = vmatprep.subr.mxu0 0.0
  %1089 = vmatpush1.msra.mxu0 0.0
  %1090 = vmatprep.subr.mxu0 0.0
  %1091 = vmatpush1.msra.mxu0 0.0
  %1092 = vmatprep.subr.mxu0 0.0
  %1093 = vmatpush1.msra.mxu0 0.0
  %1094 = vmatprep.subr.mxu0 0.0
  %1095 = vmatpush1.msra.mxu0 0.0
  %1096 = vmatprep.subr.mxu0 0.0
  %1097 = vmatpush1.msra.mxu0 0.0
  %1098 = vmatprep.subr.mxu0 0.0
  %1099 = vmatpush1.msra.mxu0 0.0
  %1100 = vmatprep.subr.mxu0 0.0
  %1101 = vmatpush1.msra.mxu0 0.0
  %1102 = vmatprep.subr.mxu0 0.0
  %1103 = vmatpush1.msra.mxu0 0.0
  %1104 = vmatprep.subr.mxu0 0.0
  %1105 = vmatpush1.msra.mxu0 0.0
  %1106 = vmatprep.subr.mxu0 0.0
  %1107 = vmatpush1.msra.mxu0 0.0
  %1108 = vmatprep.subr.mxu0 0.0
  %1109 = vmatpush1.msra.mxu0 0.0
  %1110 = vmatprep.subr.mxu0 0.0
  %1111 = vmatpush1.msra.mxu0 0.0
  %1112 = vmatprep.subr.mxu0 0.0
  %1113 = vmatpush1.msra.mxu0 0.0
  %1114 = vmatprep.subr.mxu0 0.0
  %1115 = vmatpush1.msra.mxu0 0.0
  %1116 = vmatprep.subr.mxu0 0.0
  %1117 = vmatpush1.msra.mxu0 0.0
  %1118 = vmatprep.subr.mxu0 0.0
  %1119 = vmatpush1.msra.mxu0 0.0
  %1120 = vmatprep.subr.mxu0 0.0
  %1121 = vmatpush1.msra.mxu0 0.0
  %1122 = vmatprep.subr.mxu0 0.0
  %1123 = vmatpush1.msra.mxu0 0.0
  %1124 = vmatprep.subr.mxu0 0.0
  %1125 = vmatpush1.msra.mxu0 0.0
  %1126 = vmatprep.subr.mxu0 0.0
  %1127 = vmatpush1.msra.mxu0 0.0
  %1128 = vmatprep.subr.mxu0 0.0
  %1129 = vmatpush1.msra.mxu0 0.0
  %1130 = vmatprep.subr.mxu0 0.0
  %1131 = vmatpush1.msra.mxu0 0.0
  %1132 = vmatprep.subr.mxu0 0.0
  %1133 = vmatpush1.msra.mxu0 0.0
  %1134 = vmatprep.subr.mxu0 0.0
  %1135 = vmatpush1.msra.mxu0 0.0
  %1136 = vmatprep.subr.mxu0 0.0
  %1137 = vmatpush1.msra.mxu0 0.0
  %1138 = vmatprep.subr.mxu0 0.0
  %1139 = vmatpush1.msra.mxu0 0.0
  %1140 = vmatprep.subr.mxu0 0.0
  %1141 = vmatpush1.msra.mxu0 0.0
  %1142 = vmatprep.subr.mxu0 0.0
  %1143 = vmatpush1.msra.mxu0 0.0
  %1144 = vmatprep.subr.mxu0 0.0
  %1145 = vmatpush1.msra.mxu0 0.0
  %1146 = vmatprep.mubr.f32.mxu0 0.0
  %1147 = vmatmul.mubr.f32.gmra.mrb[0].mxu0 %v984
  %v1148 = vpop.f32.mrb[0].mxu0
  %v1149 = vadd.f32 0.0, %v1148
  %v1150 = vpop.f32.mrb[0].mxu0
  %v1151 = vadd.f32 0.0, %v1150
  %1152 = vmatprep.mubr.f32.mxu0 0.0
  %1153 = vmatmul.mubr.f32.gmra.mrb[0].mxu0 %v987
  %v1154 = vpop.f32.mrb[0].mxu0
  %v1155 = vadd.f32 0.0, %v1154
  %v1156 = vpop.f32.mrb[0].mxu0
  %v1157 = vadd.f32 0.0, %v1156
  %1158 = vdwg.mxu0
  %v1159 = vadd.f32 %v967, %v1149
  %v1160 = vadd.f32 %v968, %v1151
  %v1161 = vadd.f32 %v969, %v1155
  %v1162 = vadd.f32 %v970, %v1157
  %1163 = vrot.lane.b32.xlu0 %v14, 113
  %v1164 = vpop.permute.xlu0 %1163
  %1165 = vrot.lane.b32.xlu0 %v15, 113
  %v1166 = vpop.permute.xlu0 %1165
  %vm1167 = vcmp.lt.s32.totalorder %v17, 113
  %v1168 = vsel %vm1167, %v1164, %v1166
  %v1169 = vsel %vm1167, %v1166, %v1164
  %vm1170 = vmand %vm25, %vm27
  %vm1171 = vmand %vm26, %vm28
  %v1172 = vsel %vm1170, %v1168, 0.0
  %v1173 = vsel %vm1171, %v1169, 0.0
  %s1174 = scalar_lea.vmem %s1, 96
  %v1175 = vld [vmem:[%s1174] sm:$0xff]
  %v1176 = vld [vmem:[%s1174 + $0x8] sm:$0xff]
  %v1178 = vsel %vm56, %v1175, 0
  %v1181 = vsel %vm56, %v1176, 0
  %v1184 = vsel %vm63, %v1172, 0
  %v1187 = vsel %vm63, %v1173, 0
  %1189 = vmatprep.subr.mxu0 %v1187
  %1190 = vmatpush1.msra.mxu0 %v1184
  %1191 = vmatprep.subr.mxu0 0.0
  %1192 = vmatpush1.msra.mxu0 0.0
  %1193 = vmatprep.subr.mxu0 0.0
  %1194 = vmatpush1.msra.mxu0 0.0
  %1195 = vmatprep.subr.mxu0 0.0
  %1196 = vmatpush1.msra.mxu0 0.0
  %1197 = vmatprep.subr.mxu0 0.0
  %1198 = vmatpush1.msra.mxu0 0.0
  %1199 = vmatprep.subr.mxu0 0.0
  %1200 = vmatpush1.msra.mxu0 0.0
  %1201 = vmatprep.subr.mxu0 0.0
  %1202 = vmatpush1.msra.mxu0 0.0
  %1203 = vmatprep.subr.mxu0 0.0
  %1204 = vmatpush1.msra.mxu0 0.0
  %1205 = vmatprep.subr.mxu0 0.0
  %1206 = vmatpush1.msra.mxu0 0.0
  %1207 = vmatprep.subr.mxu0 0.0
  %1208 = vmatpush1.msra.mxu0 0.0
  %1209 = vmatprep.subr.mxu0 0.0
  %1210 = vmatpush1.msra.mxu0 0.0
  %1211 = vmatprep.subr.mxu0 0.0
  %1212 = vmatpush1.msra.mxu0 0.0
  %1213 = vmatprep.subr.mxu0 0.0
  %1214 = vmatpush1.msra.mxu0 0.0
  %1215 = vmatprep.subr.mxu0 0.0
  %1216 = vmatpush1.msra.mxu0 0.0
  %1217 = vmatprep.subr.mxu0 0.0
  %1218 = vmatpush1.msra.mxu0 0.0
  %1219 = vmatprep.subr.mxu0 0.0
  %1220 = vmatpush1.msra.mxu0 0.0
  %1221 = vmatprep.subr.mxu0 0.0
  %1222 = vmatpush1.msra.mxu0 0.0
  %1223 = vmatprep.subr.mxu0 0.0
  %1224 = vmatpush1.msra.mxu0 0.0
  %1225 = vmatprep.subr.mxu0 0.0
  %1226 = vmatpush1.msra.mxu0 0.0
  %1227 = vmatprep.subr.mxu0 0.0
  %1228 = vmatpush1.msra.mxu0 0.0
  %1229 = vmatprep.subr.mxu0 0.0
  %1230 = vmatpush1.msra.mxu0 0.0
  %1231 = vmatprep.subr.mxu0 0.0
  %1232 = vmatpush1.msra.mxu0 0.0
  %1233 = vmatprep.subr.mxu0 0.0
  %1234 = vmatpush1.msra.mxu0 0.0
  %1235 = vmatprep.subr.mxu0 0.0
  %1236 = vmatpush1.msra.mxu0 0.0
  %1237 = vmatprep.subr.mxu0 0.0
  %1238 = vmatpush1.msra.mxu0 0.0
  %1239 = vmatprep.subr.mxu0 0.0
  %1240 = vmatpush1.msra.mxu0 0.0
  %1241 = vmatprep.subr.mxu0 0.0
  %1242 = vmatpush1.msra.mxu0 0.0
  %1243 = vmatprep.subr.mxu0 0.0
  %1244 = vmatpush1.msra.mxu0 0.0
  %1245 = vmatprep.subr.mxu0 0.0
  %1246 = vmatpush1.msra.mxu0 0.0
  %1247 = vmatprep.subr.mxu0 0.0
  %1248 = vmatpush1.msra.mxu0 0.0
  %1249 = vmatprep.subr.mxu0 0.0
  %1250 = vmatpush1.msra.mxu0 0.0
  %1251 = vmatprep.subr.mxu0 0.0
  %1252 = vmatpush1.msra.mxu0 0.0
  %1253 = vmatprep.mubr.f32.mxu0 0.0
  %1254 = vmatmul.mubr.f32.gmra.mrb[0].mxu0 %v1178
  %v1255 = vpop.f32.mrb[0].mxu0
  %v1256 = vadd.f32 0.0, %v1255
  %v1257 = vpop.f32.mrb[0].mxu0
  %v1258 = vadd.f32 0.0, %v1257
  %1259 = vmatprep.mubr.f32.mxu0 0.0
  %1260 = vmatmul.mubr.f32.gmra.mrb[0].mxu0 %v1181
  %v1261 = vpop.f32.mrb[0].mxu0
  %v1262 = vadd.f32 0.0, %v1261
  %v1263 = vpop.f32.mrb[0].mxu0
  %v1264 = vadd.f32 0.0, %v1263
  %1265 = vdwg.mxu0
  %v1266 = vadd.f32 %v1072, %v1256
  %v1267 = vadd.f32 %v1073, %v1258
  %v1268 = vadd.f32 %v1074, %v1262
  %v1269 = vadd.f32 %v1075, %v1264
  %v1270 = vrot.slane %v1172, 4
  %v1271 = vrot.slane %v1173, 4
  %v1272 = vsel %vm63, %v1270, 0
  %v1274 = vsel %vm63, %v1271, 0
  %1276 = vmatprep.subr.mxu0 %v1274
  %1277 = vmatpush1.msra.mxu0 %v1272
  %1278 = vmatprep.subr.mxu0 0.0
  %1279 = vmatpush1.msra.mxu0 0.0
  %1280 = vmatprep.subr.mxu0 0.0
  %1281 = vmatpush1.msra.mxu0 0.0
  %1282 = vmatprep.subr.mxu0 0.0
  %1283 = vmatpush1.msra.mxu0 0.0
  %1284 = vmatprep.subr.mxu0 0.0
  %1285 = vmatpush1.msra.mxu0 0.0
  %1286 = vmatprep.subr.mxu0 0.0
  %1287 = vmatpush1.msra.mxu0 0.0
  %1288 = vmatprep.subr.mxu0 0.0
  %1289 = vmatpush1.msra.mxu0 0.0
  %1290 = vmatprep.subr.mxu0 0.0
  %1291 = vmatpush1.msra.mxu0 0.0
  %1292 = vmatprep.subr.mxu0 0.0
  %1293 = vmatpush1.msra.mxu0 0.0
  %1294 = vmatprep.subr.mxu0 0.0
  %1295 = vmatpush1.msra.mxu0 0.0
  %1296 = vmatprep.subr.mxu0 0.0
  %1297 = vmatpush1.msra.mxu0 0.0
  %1298 = vmatprep.subr.mxu0 0.0
  %1299 = vmatpush1.msra.mxu0 0.0
  %1300 = vmatprep.subr.mxu0 0.0
  %1301 = vmatpush1.msra.mxu0 0.0
  %1302 = vmatprep.subr.mxu0 0.0
  %1303 = vmatpush1.msra.mxu0 0.0
  %1304 = vmatprep.subr.mxu0 0.0
  %1305 = vmatpush1.msra.mxu0 0.0
  %1306 = vmatprep.subr.mxu0 0.0
  %1307 = vmatpush1.msra.mxu0 0.0
  %1308 = vmatprep.subr.mxu0 0.0
  %1309 = vmatpush1.msra.mxu0 0.0
  %1310 = vmatprep.subr.mxu0 0.0
  %1311 = vmatpush1.msra.mxu0 0.0
  %1312 = vmatprep.subr.mxu0 0.0
  %1313 = vmatpush1.msra.mxu0 0.0
  %1314 = vmatprep.subr.mxu0 0.0
  %1315 = vmatpush1.msra.mxu0 0.0
  %1316 = vmatprep.subr.mxu0 0.0
  %1317 = vmatpush1.msra.mxu0 0.0
  %1318 = vmatprep.subr.mxu0 0.0
  %1319 = vmatpush1.msra.mxu0 0.0
  %1320 = vmatprep.subr.mxu0 0.0
  %1321 = vmatpush1.msra.mxu0 0.0
  %1322 = vmatprep.subr.mxu0 0.0
  %1323 = vmatpush1.msra.mxu0 0.0
  %1324 = vmatprep.subr.mxu0 0.0
  %1325 = vmatpush1.msra.mxu0 0.0
  %1326 = vmatprep.subr.mxu0 0.0
  %1327 = vmatpush1.msra.mxu0 0.0
  %1328 = vmatprep.subr.mxu0 0.0
  %1329 = vmatpush1.msra.mxu0 0.0
  %1330 = vmatprep.subr.mxu0 0.0
  %1331 = vmatpush1.msra.mxu0 0.0
  %1332 = vmatprep.subr.mxu0 0.0
  %1333 = vmatpush1.msra.mxu0 0.0
  %1334 = vmatprep.subr.mxu0 0.0
  %1335 = vmatpush1.msra.mxu0 0.0
  %1336 = vmatprep.subr.mxu0 0.0
  %1337 = vmatpush1.msra.mxu0 0.0
  %1338 = vmatprep.subr.mxu0 0.0
  %1339 = vmatpush1.msra.mxu0 0.0
  %1340 = vmatprep.mubr.f32.mxu0 0.0
  %1341 = vmatmul.mubr.f32.gmra.mrb[0].mxu0 %v1178
  %v1342 = vpop.f32.mrb[0].mxu0
  %v1343 = vadd.f32 0.0, %v1342
  %v1344 = vpop.f32.mrb[0].mxu0
  %v1345 = vadd.f32 0.0, %v1344
  %1346 = vmatprep.mubr.f32.mxu0 0.0
  %1347 = vmatmul.mubr.f32.gmra.mrb[0].mxu0 %v1181
  %v1348 = vpop.f32.mrb[0].mxu0
  %v1349 = vadd.f32 0.0, %v1348
  %v1350 = vpop.f32.mrb[0].mxu0
  %v1351 = vadd.f32 0.0, %v1350
  %1352 = vdwg.mxu0
  %v1353 = vadd.f32 %v1159, %v1343
  %v1354 = vadd.f32 %v1160, %v1345
  %v1355 = vadd.f32 %v1161, %v1349
  %v1356 = vadd.f32 %v1162, %v1351
  %1357 = vrot.lane.b32.xlu0 %v14, 112
  %v1358 = vpop.permute.xlu0 %1357
  %1359 = vrot.lane.b32.xlu0 %v15, 112
  %v1360 = vpop.permute.xlu0 %1359
  %vm1361 = vcmp.lt.s32.totalorder %v17, 112
  %v1362 = vsel %vm1361, %v1358, %v1360
  %v1363 = vsel %vm1361, %v1360, %v1358
  %v1364 = vsel %vm25, %v1362, 0.0
  %v1365 = vsel %vm26, %v1363, 0.0
  %s1366 = scalar_lea.vmem %s1, 112
  %v1367 = vld [vmem:[%s1366] sm:$0xff]
  %v1368 = vld [vmem:[%s1366 + $0x8] sm:$0xff]
  %v1370 = vsel %vm56, %v1367, 0
  %v1373 = vsel %vm56, %v1368, 0
  %v1376 = vsel %vm63, %v1364, 0
  %v1379 = vsel %vm63, %v1365, 0
  %1381 = vmatprep.subr.mxu0 %v1379
  %1382 = vmatpush1.msra.mxu0 %v1376
  %1383 = vmatprep.subr.mxu0 0.0
  %1384 = vmatpush1.msra.mxu0 0.0
  %1385 = vmatprep.subr.mxu0 0.0
  %1386 = vmatpush1.msra.mxu0 0.0
  %1387 = vmatprep.subr.mxu0 0.0
  %1388 = vmatpush1.msra.mxu0 0.0
  %1389 = vmatprep.subr.mxu0 0.0
  %1390 = vmatpush1.msra.mxu0 0.0
  %1391 = vmatprep.subr.mxu0 0.0
  %1392 = vmatpush1.msra.mxu0 0.0
  %1393 = vmatprep.subr.mxu0 0.0
  %1394 = vmatpush1.msra.mxu0 0.0
  %1395 = vmatprep.subr.mxu0 0.0
  %1396 = vmatpush1.msra.mxu0 0.0
  %1397 = vmatprep.subr.mxu0 0.0
  %1398 = vmatpush1.msra.mxu0 0.0
  %1399 = vmatprep.subr.mxu0 0.0
  %1400 = vmatpush1.msra.mxu0 0.0
  %1401 = vmatprep.subr.mxu0 0.0
  %1402 = vmatpush1.msra.mxu0 0.0
  %1403 = vmatprep.subr.mxu0 0.0
  %1404 = vmatpush1.msra.mxu0 0.0
  %1405 = vmatprep.subr.mxu0 0.0
  %1406 = vmatpush1.msra.mxu0 0.0
  %1407 = vmatprep.subr.mxu0 0.0
  %1408 = vmatpush1.msra.mxu0 0.0
  %1409 = vmatprep.subr.mxu0 0.0
  %1410 = vmatpush1.msra.mxu0 0.0
  %1411 = vmatprep.subr.mxu0 0.0
  %1412 = vmatpush1.msra.mxu0 0.0
  %1413 = vmatprep.subr.mxu0 0.0
  %1414 = vmatpush1.msra.mxu0 0.0
  %1415 = vmatprep.subr.mxu0 0.0
  %1416 = vmatpush1.msra.mxu0 0.0
  %1417 = vmatprep.subr.mxu0 0.0
  %1418 = vmatpush1.msra.mxu0 0.0
  %1419 = vmatprep.subr.mxu0 0.0
  %1420 = vmatpush1.msra.mxu0 0.0
  %1421 = vmatprep.subr.mxu0 0.0
  %1422 = vmatpush1.msra.mxu0 0.0
  %1423 = vmatprep.subr.mxu0 0.0
  %1424 = vmatpush1.msra.mxu0 0.0
  %1425 = vmatprep.subr.mxu0 0.0
  %1426 = vmatpush1.msra.mxu0 0.0
  %1427 = vmatprep.subr.mxu0 0.0
  %1428 = vmatpush1.msra.mxu0 0.0
  %1429 = vmatprep.subr.mxu0 0.0
  %1430 = vmatpush1.msra.mxu0 0.0
  %1431 = vmatprep.subr.mxu0 0.0
  %1432 = vmatpush1.msra.mxu0 0.0
  %1433 = vmatprep.subr.mxu0 0.0
  %1434 = vmatpush1.msra.mxu0 0.0
  %1435 = vmatprep.subr.mxu0 0.0
  %1436 = vmatpush1.msra.mxu0 0.0
  %1437 = vmatprep.subr.mxu0 0.0
  %1438 = vmatpush1.msra.mxu0 0.0
  %1439 = vmatprep.subr.mxu0 0.0
  %1440 = vmatpush1.msra.mxu0 0.0
  %1441 = vmatprep.subr.mxu0 0.0
  %1442 = vmatpush1.msra.mxu0 0.0
  %1443 = vmatprep.subr.mxu0 0.0
  %1444 = vmatpush1.msra.mxu0 0.0
  %1445 = vmatprep.mubr.f32.mxu0 0.0
  %1446 = vmatmul.mubr.f32.gmra.mrb[0].mxu0 %v1370
  %v1447 = vpop.f32.mrb[0].mxu0
  %v1448 = vadd.f32 0.0, %v1447
  %v1449 = vpop.f32.mrb[0].mxu0
  %v1450 = vadd.f32 0.0, %v1449
  %1451 = vmatprep.mubr.f32.mxu0 0.0
  %1452 = vmatmul.mubr.f32.gmra.mrb[0].mxu0 %v1373
  %v1453 = vpop.f32.mrb[0].mxu0
  %v1454 = vadd.f32 0.0, %v1453
  %v1455 = vpop.f32.mrb[0].mxu0
  %v1456 = vadd.f32 0.0, %v1455
  %1457 = vdwg.mxu0
  %v1458 = vadd.f32 %v1266, %v1448
  %v1459 = vadd.f32 %v1267, %v1450
  %v1460 = vadd.f32 %v1268, %v1454
  %v1461 = vadd.f32 %v1269, %v1456
  %v1462 = vrot.slane %v1364, 4
  %v1463 = vrot.slane %v1365, 4
  %v1464 = vsel %vm63, %v1462, 0
  %v1466 = vsel %vm63, %v1463, 0
  %1468 = vmatprep.subr.mxu0 %v1466
  %1469 = vmatpush1.msra.mxu0 %v1464
  %1470 = vmatprep.subr.mxu0 0.0
  %1471 = vmatpush1.msra.mxu0 0.0
  %1472 = vmatprep.subr.mxu0 0.0
  %1473 = vmatpush1.msra.mxu0 0.0
  %1474 = vmatprep.subr.mxu0 0.0
  %1475 = vmatpush1.msra.mxu0 0.0
  %1476 = vmatprep.subr.mxu0 0.0
  %1477 = vmatpush1.msra.mxu0 0.0
  %1478 = vmatprep.subr.mxu0 0.0
  %1479 = vmatpush1.msra.mxu0 0.0
  %1480 = vmatprep.subr.mxu0 0.0
  %1481 = vmatpush1.msra.mxu0 0.0
  %1482 = vmatprep.subr.mxu0 0.0
  %1483 = vmatpush1.msra.mxu0 0.0
  %1484 = vmatprep.subr.mxu0 0.0
  %1485 = vmatpush1.msra.mxu0 0.0
  %1486 = vmatprep.subr.mxu0 0.0
  %1487 = vmatpush1.msra.mxu0 0.0
  %1488 = vmatprep.subr.mxu0 0.0
  %1489 = vmatpush1.msra.mxu0 0.0
  %1490 = vmatprep.subr.mxu0 0.0
  %1491 = vmatpush1.msra.mxu0 0.0
  %1492 = vmatprep.subr.mxu0 0.0
  %1493 = vmatpush1.msra.mxu0 0.0
  %1494 = vmatprep.subr.mxu0 0.0
  %1495 = vmatpush1.msra.mxu0 0.0
  %1496 = vmatprep.subr.mxu0 0.0
  %1497 = vmatpush1.msra.mxu0 0.0
  %1498 = vmatprep.subr.mxu0 0.0
  %1499 = vmatpush1.msra.mxu0 0.0
  %1500 = vmatprep.subr.mxu0 0.0
  %1501 = vmatpush1.msra.mxu0 0.0
  %1502 = vmatprep.subr.mxu0 0.0
  %1503 = vmatpush1.msra.mxu0 0.0
  %1504 = vmatprep.subr.mxu0 0.0
  %1505 = vmatpush1.msra.mxu0 0.0
  %1506 = vmatprep.subr.mxu0 0.0
  %1507 = vmatpush1.msra.mxu0 0.0
  %1508 = vmatprep.subr.mxu0 0.0
  %1509 = vmatpush1.msra.mxu0 0.0
  %1510 = vmatprep.subr.mxu0 0.0
  %1511 = vmatpush1.msra.mxu0 0.0
  %1512 = vmatprep.subr.mxu0 0.0
  %1513 = vmatpush1.msra.mxu0 0.0
  %1514 = vmatprep.subr.mxu0 0.0
  %1515 = vmatpush1.msra.mxu0 0.0
  %1516 = vmatprep.subr.mxu0 0.0
  %1517 = vmatpush1.msra.mxu0 0.0
  %1518 = vmatprep.subr.mxu0 0.0
  %1519 = vmatpush1.msra.mxu0 0.0
  %1520 = vmatprep.subr.mxu0 0.0
  %1521 = vmatpush1.msra.mxu0 0.0
  %1522 = vmatprep.subr.mxu0 0.0
  %1523 = vmatpush1.msra.mxu0 0.0
  %1524 = vmatprep.subr.mxu0 0.0
  %1525 = vmatpush1.msra.mxu0 0.0
  %1526 = vmatprep.subr.mxu0 0.0
  %1527 = vmatpush1.msra.mxu0 0.0
  %1528 = vmatprep.subr.mxu0 0.0
  %1529 = vmatpush1.msra.mxu0 0.0
  %1530 = vmatprep.subr.mxu0 0.0
  %1531 = vmatpush1.msra.mxu0 0.0
  %1532 = vmatprep.mubr.f32.mxu0 0.0
  %1533 = vmatmul.mubr.f32.gmra.mrb[0].mxu0 %v1370
  %v1534 = vpop.f32.mrb[0].mxu0
  %v1535 = vadd.f32 0.0, %v1534
  %v1536 = vpop.f32.mrb[0].mxu0
  %v1537 = vadd.f32 0.0, %v1536
  %1538 = vmatprep.mubr.f32.mxu0 0.0
  %1539 = vmatmul.mubr.f32.gmra.mrb[0].mxu0 %v1373
  %v1540 = vpop.f32.mrb[0].mxu0
  %v1541 = vadd.f32 0.0, %v1540
  %v1542 = vpop.f32.mrb[0].mxu0
  %v1543 = vadd.f32 0.0, %v1542
  %1544 = vdwg.mxu0
  %v1545 = vadd.f32 %v1353, %v1535
  %v1546 = vadd.f32 %v1354, %v1537
  %v1547 = vadd.f32 %v1355, %v1541
  %v1548 = vadd.f32 %v1356, %v1543
  %1549 = vrot.lane.b32.xlu0 %v14, 111
  %v1550 = vpop.permute.xlu0 %1549
  %1551 = vrot.lane.b32.xlu0 %v15, 111
  %v1552 = vpop.permute.xlu0 %1551
  %vm1553 = vcmp.lt.s32.totalorder %v17, 111
  %v1554 = vsel %vm1553, %v1550, %v1552
  %v1555 = vsel %vm1553, %v1552, %v1550
  %vm1556 = vmand %vm25, %vm29
  %vm1557 = vmand %vm26, %vm30
  %v1558 = vsel %vm1556, %v1554, 0.0
  %v1559 = vsel %vm1557, %v1555, 0.0
  %s1560 = scalar_lea.vmem %s1, 128
  %v1561 = vld [vmem:[%s1560] sm:$0xff]
  %v1562 = vld [vmem:[%s1560 + $0x8] sm:$0xff]
  %v1564 = vsel %vm56, %v1561, 0
  %v1567 = vsel %vm56, %v1562, 0
  %v1570 = vsel %vm63, %v1558, 0
  %v1573 = vsel %vm63, %v1559, 0
  %1575 = vmatprep.subr.mxu0 %v1573
  %1576 = vmatpush1.msra.mxu0 %v1570
  %1577 = vmatprep.subr.mxu0 0.0
  %1578 = vmatpush1.msra.mxu0 0.0
  %1579 = vmatprep.subr.mxu0 0.0
  %1580 = vmatpush1.msra.mxu0 0.0
  %1581 = vmatprep.subr.mxu0 0.0
  %1582 = vmatpush1.msra.mxu0 0.0
  %1583 = vmatprep.subr.mxu0 0.0
  %1584 = vmatpush1.msra.mxu0 0.0
  %1585 = vmatprep.subr.mxu0 0.0
  %1586 = vmatpush1.msra.mxu0 0.0
  %1587 = vmatprep.subr.mxu0 0.0
  %1588 = vmatpush1.msra.mxu0 0.0
  %1589 = vmatprep.subr.mxu0 0.0
  %1590 = vmatpush1.msra.mxu0 0.0
  %1591 = vmatprep.subr.mxu0 0.0
  %1592 = vmatpush1.msra.mxu0 0.0
  %1593 = vmatprep.subr.mxu0 0.0
  %1594 = vmatpush1.msra.mxu0 0.0
  %1595 = vmatprep.subr.mxu0 0.0
  %1596 = vmatpush1.msra.mxu0 0.0
  %1597 = vmatprep.subr.mxu0 0.0
  %1598 = vmatpush1.msra.mxu0 0.0
  %1599 = vmatprep.subr.mxu0 0.0
  %1600 = vmatpush1.msra.mxu0 0.0
  %1601 = vmatprep.subr.mxu0 0.0
  %1602 = vmatpush1.msra.mxu0 0.0
  %1603 = vmatprep.subr.mxu0 0.0
  %1604 = vmatpush1.msra.mxu0 0.0
  %1605 = vmatprep.subr.mxu0 0.0
  %1606 = vmatpush1.msra.mxu0 0.0
  %1607 = vmatprep.subr.mxu0 0.0
  %1608 = vmatpush1.msra.mxu0 0.0
  %1609 = vmatprep.subr.mxu0 0.0
  %1610 = vmatpush1.msra.mxu0 0.0
  %1611 = vmatprep.subr.mxu0 0.0
  %1612 = vmatpush1.msra.mxu0 0.0
  %1613 = vmatprep.subr.mxu0 0.0
  %1614 = vmatpush1.msra.mxu0 0.0
  %1615 = vmatprep.subr.mxu0 0.0
  %1616 = vmatpush1.msra.mxu0 0.0
  %1617 = vmatprep.subr.mxu0 0.0
  %1618 = vmatpush1.msra.mxu0 0.0
  %1619 = vmatprep.subr.mxu0 0.0
  %1620 = vmatpush1.msra.mxu0 0.0
  %1621 = vmatprep.subr.mxu0 0.0
  %1622 = vmatpush1.msra.mxu0 0.0
  %1623 = vmatprep.subr.mxu0 0.0
  %1624 = vmatpush1.msra.mxu0 0.0
  %1625 = vmatprep.subr.mxu0 0.0
  %1626 = vmatpush1.msra.mxu0 0.0
  %1627 = vmatprep.subr.mxu0 0.0
  %1628 = vmatpush1.msra.mxu0 0.0
  %1629 = vmatprep.subr.mxu0 0.0
  %1630 = vmatpush1.msra.mxu0 0.0
  %1631 = vmatprep.subr.mxu0 0.0
  %1632 = vmatpush1.msra.mxu0 0.0
  %1633 = vmatprep.subr.mxu0 0.0
  %1634 = vmatpush1.msra.mxu0 0.0
  %1635 = vmatprep.subr.mxu0 0.0
  %1636 = vmatpush1.msra.mxu0 0.0
  %1637 = vmatprep.subr.mxu0 0.0
  %1638 = vmatpush1.msra.mxu0 0.0
  %1639 = vmatprep.mubr.f32.mxu0 0.0
  %1640 = vmatmul.mubr.f32.gmra.mrb[0].mxu0 %v1564
  %v1641 = vpop.f32.mrb[0].mxu0
  %v1642 = vadd.f32 0.0, %v1641
  %v1643 = vpop.f32.mrb[0].mxu0
  %v1644 = vadd.f32 0.0, %v1643
  %1645 = vmatprep.mubr.f32.mxu0 0.0
  %1646 = vmatmul.mubr.f32.gmra.mrb[0].mxu0 %v1567
  %v1647 = vpop.f32.mrb[0].mxu0
  %v1648 = vadd.f32 0.0, %v1647
  %v1649 = vpop.f32.mrb[0].mxu0
  %v1650 = vadd.f32 0.0, %v1649
  %1651 = vdwg.mxu0
  %v1652 = vadd.f32 %v1458, %v1642
  %v1653 = vadd.f32 %v1459, %v1644
  %v1654 = vadd.f32 %v1460, %v1648
  %v1655 = vadd.f32 %v1461, %v1650
  %v1656 = vrot.slane %v1558, 4
  %v1657 = vrot.slane %v1559, 4
  %v1658 = vsel %vm63, %v1656, 0
  %v1660 = vsel %vm63, %v1657, 0
  %1662 = vmatprep.subr.mxu0 %v1660
  %1663 = vmatpush1.msra.mxu0 %v1658
  %1664 = vmatprep.subr.mxu0 0.0
  %1665 = vmatpush1.msra.mxu0 0.0
  %1666 = vmatprep.subr.mxu0 0.0
  %1667 = vmatpush1.msra.mxu0 0.0
  %1668 = vmatprep.subr.mxu0 0.0
  %1669 = vmatpush1.msra.mxu0 0.0
  %1670 = vmatprep.subr.mxu0 0.0
  %1671 = vmatpush1.msra.mxu0 0.0
  %1672 = vmatprep.subr.mxu0 0.0
  %1673 = vmatpush1.msra.mxu0 0.0
  %1674 = vmatprep.subr.mxu0 0.0
  %1675 = vmatpush1.msra.mxu0 0.0
  %1676 = vmatprep.subr.mxu0 0.0
  %1677 = vmatpush1.msra.mxu0 0.0
  %1678 = vmatprep.subr.mxu0 0.0
  %1679 = vmatpush1.msra.mxu0 0.0
  %1680 = vmatprep.subr.mxu0 0.0
  %1681 = vmatpush1.msra.mxu0 0.0
  %1682 = vmatprep.subr.mxu0 0.0
  %1683 = vmatpush1.msra.mxu0 0.0
  %1684 = vmatprep.subr.mxu0 0.0
  %1685 = vmatpush1.msra.mxu0 0.0
  %1686 = vmatprep.subr.mxu0 0.0
  %1687 = vmatpush1.msra.mxu0 0.0
  %1688 = vmatprep.subr.mxu0 0.0
  %1689 = vmatpush1.msra.mxu0 0.0
  %1690 = vmatprep.subr.mxu0 0.0
  %1691 = vmatpush1.msra.mxu0 0.0
  %1692 = vmatprep.subr.mxu0 0.0
  %1693 = vmatpush1.msra.mxu0 0.0
  %1694 = vmatprep.subr.mxu0 0.0
  %1695 = vmatpush1.msra.mxu0 0.0
  %1696 = vmatprep.subr.mxu0 0.0
  %1697 = vmatpush1.msra.mxu0 0.0
  %1698 = vmatprep.subr.mxu0 0.0
  %1699 = vmatpush1.msra.mxu0 0.0
  %1700 = vmatprep.subr.mxu0 0.0
  %1701 = vmatpush1.msra.mxu0 0.0
  %1702 = vmatprep.subr.mxu0 0.0
  %1703 = vmatpush1.msra.mxu0 0.0
  %1704 = vmatprep.subr.mxu0 0.0
  %1705 = vmatpush1.msra.mxu0 0.0
  %1706 = vmatprep.subr.mxu0 0.0
  %1707 = vmatpush1.msra.mxu0 0.0
  %1708 = vmatprep.subr.mxu0 0.0
  %1709 = vmatpush1.msra.mxu0 0.0
  %1710 = vmatprep.subr.mxu0 0.0
  %1711 = vmatpush1.msra.mxu0 0.0
  %1712 = vmatprep.subr.mxu0 0.0
  %1713 = vmatpush1.msra.mxu0 0.0
  %1714 = vmatprep.subr.mxu0 0.0
  %1715 = vmatpush1.msra.mxu0 0.0
  %1716 = vmatprep.subr.mxu0 0.0
  %1717 = vmatpush1.msra.mxu0 0.0
  %1718 = vmatprep.subr.mxu0 0.0
  %1719 = vmatpush1.msra.mxu0 0.0
  %1720 = vmatprep.subr.mxu0 0.0
  %1721 = vmatpush1.msra.mxu0 0.0
  %1722 = vmatprep.subr.mxu0 0.0
  %1723 = vmatpush1.msra.mxu0 0.0
  %1724 = vmatprep.subr.mxu0 0.0
  %1725 = vmatpush1.msra.mxu0 0.0
  %1726 = vmatprep.mubr.f32.mxu0 0.0
  %1727 = vmatmul.mubr.f32.gmra.mrb[0].mxu0 %v1564
  %v1728 = vpop.f32.mrb[0].mxu0
  %v1729 = vadd.f32 0.0, %v1728
  %v1730 = vpop.f32.mrb[0].mxu0
  %v1731 = vadd.f32 0.0, %v1730
  %1732 = vmatprep.mubr.f32.mxu0 0.0
  %1733 = vmatmul.mubr.f32.gmra.mrb[0].mxu0 %v1567
  %v1734 = vpop.f32.mrb[0].mxu0
  %v1735 = vadd.f32 0.0, %v1734
  %v1736 = vpop.f32.mrb[0].mxu0
  %v1737 = vadd.f32 0.0, %v1736
  %1738 = vdwg.mxu0
  %v1739 = vadd.f32 %v1545, %v1729
  %v1740 = vadd.f32 %v1546, %v1731
  %v1741 = vadd.f32 %v1547, %v1735
  %v1742 = vadd.f32 %v1548, %v1737
  %v1743 = vld [vmem:[%s2] sm:$0xff]
  %v1744 = vld [vmem:[%s2 + $0x8] sm:$0xff]
  %1746 = vset.pattern.permute.xlu0 0
  %1747 = vperm.xlu0 %1746, %v1743
  %v1748 = vpop.permute.xlu0 %1747
  %1751 = vset.pattern.permute.xlu0 0
  %1752 = vperm.xlu0 %1751, %v1744
  %v1753 = vpop.permute.xlu0 %1752
  %v1755 = vadd.f32 %v1652, %v1748
  %v1756 = vadd.f32 %v1653, %v1748
  %v1757 = vadd.f32 %v1654, %v1753
  %v1758 = vadd.f32 %v1655, %v1753
  %v1759 = vtanh.pop %v1755
  %v1760 = vtanh.pop %v1756
  %v1761 = vtanh.pop %v1757
  %v1762 = vtanh.pop %v1758
  %v1763 = vadd.f32 %v1739, %v1748
  %v1764 = vadd.f32 %v1740, %v1748
  %v1765 = vadd.f32 %v1741, %v1753
  %v1766 = vadd.f32 %v1742, %v1753
  %v1767 = vtanh.pop %v1763
  %v1768 = vtanh.pop %v1764
  %v1769 = vtanh.pop %v1765
  %v1770 = vtanh.pop %v1766
  %1771 = vst [vmem:[%s3] sm:$0xff] %v1759
  %1772 = vst [vmem:[%s3 + $0x8] sm:$0xff] %v1760
  %1773 = vst [vmem:[%s3 + $0x10] sm:$0xff] %v1761
  %1774 = vst [vmem:[%s3 + $0x18] sm:$0xff] %v1762
  %1775 = vst [vmem:[%s3 + $0x20] sm:$0xff] %v1767
  %1776 = vst [vmem:[%s3 + $0x28] sm:$0xff] %v1768
  %1777 = vst [vmem:[%s3 + $0x30] sm:$0xff] %v1769
  %1778 = vst [vmem:[%s3 + $0x38] sm:$0xff] %v1770
  // Predicated region
  $region14: #{subpixel_conv.1} parent=0 // pred_check
    _
  $region15: #{subpixel_conv.1} parent=0 // pred_check_branch
    %1780 = sbr.rel (0) target = $region17
  $region16: #{subpixel_conv.1} parent=0 // pred_region
    _
  $region17: #{subpixel_conv.1} parent=0 // pred_fallthru
    _
  // Predicated region
  $region18: #{subpixel_conv.1} parent=0 // pred_check
    _
  $region19: #{subpixel_conv.1} parent=0 // pred_check_branch
    %1782 = sbr.rel (0) target = $region21
  $region20: #{subpixel_conv.1} parent=0 // pred_region
    _
  $region21: #{subpixel_conv.1} parent=0 // pred_fallthru
    _

</llo_original>
